<compile_context>
chip_gen: v7x
topology: tpu7x:2x2x1
jax: 0.10.0
libtpu: 0.0.40
codegen_flags: <defaults>
</compile_context>

<pallas_src>
import math

import jax
import jax.numpy as jnp
from jax import lax
from jax.experimental import pallas as pl
from jax.experimental.pallas import tpu as pltpu


def _layer_norm_f32(x, gamma, beta, eps=1e-5):
    x32 = x.astype(jnp.float32)
    mu = jnp.mean(x32, axis=-1, keepdims=True)
    var = jnp.mean((x32 - mu) ** 2, axis=-1, keepdims=True)
    return (x32 - mu) * lax.rsqrt(var + eps) * gamma + beta


def residual_attention_block_kernel(
    x_ref,                      # (nb, L, D) f32
    ln1_g_ref, ln1_b_ref,       # (1, D) f32
    wqkv_ref, bqkv_ref,         # (D, 3D) bf16, (1, 3D) f32  (head-blocked [q|k|v] cols, q pre-scaled)
    wo_ref, bo_ref,             # (H, hd, D) bf16, (1, D) f32
    ln2_g_ref, ln2_b_ref,       # (1, D) f32
    wfc_ref, bfc_ref,           # (D, 4D) bf16, (1, 4D) f32
    wproj_ref, bproj_ref,       # (4D, D) bf16, (1, D) f32
    out_ref,                    # (nb, L, D)
    qkv_s,                      # (H, T, 3*hd) bf16 scratch: fused QKV, head-blocked
    acc_s,                      # (T, D) f32 scratch: attention-output accumulator
):
    h = pl.program_id(1)
    nb, L, D = x_ref.shape
    H = qkv_s.shape[0]
    hd = wo_ref.shape[1]
    T = nb * L
    hb = 3 * hd                 # per-head slab width in the qkv scratch

    # ---- head-step 0: LayerNorm + ONE full-width fused QKV projection ----
    @pl.when(h == 0)
    def _init():
        x32 = x_ref[...].reshape(T, D).astype(jnp.float32)
        xn1 = _layer_norm_f32(x32, ln1_g_ref[...], ln1_b_ref[...]).astype(jnp.bfloat16)
        qkv = (jnp.dot(xn1, wqkv_ref[...], preferred_element_type=jnp.float32)
               + bqkv_ref[...]).astype(jnp.bfloat16)            # (T, 3D)
        # Static fill loop: head i's [q|k|v] columns -> scratch plane i.
        for i in range(H):
            qkv_s[i] = qkv[:, i * hb:(i + 1) * hb]
        acc_s[...] = jnp.zeros_like(acc_s)

    # ---- per-head attention (this head's slab, dynamic leading-axis index) ----
    qkv_h = qkv_s[h]                                            # (T, 3*hd) bf16
    q = qkv_h[:, 0 * hd:1 * hd].reshape(nb, L, hd)              # already scaled
    k = qkv_h[:, 1 * hd:2 * hd].reshape(nb, L, hd)
    v = qkv_h[:, 2 * hd:3 * hd].reshape(nb, L, hd)

    s = jnp.einsum("nqd,nkd->nqk", q, k, preferred_element_type=jnp.float32)
    s = s - jnp.max(s, axis=-1, keepdims=True)
    p = jnp.exp(s)
    p = p / jnp.sum(p, axis=-1, keepdims=True)                  # exact softmax
    o = jnp.einsum("nqk,nkd->nqd", p.astype(jnp.bfloat16), v,
                   preferred_element_type=jnp.float32)          # (nb, L, hd)

    # Fuse the head concat into the output projection (accumulate per head).
    acc_s[...] += jnp.dot(o.reshape(T, hd).astype(jnp.bfloat16), wo_ref[h],
                          preferred_element_type=jnp.float32)

    # ---- last head: residual + ln_2 + MLP (QuickGELU) + residual ----
    @pl.when(h == pl.num_programs(1) - 1)
    def _finalize():
        x32 = x_ref[...].reshape(T, D).astype(jnp.float32)
        x1 = x32 + acc_s[...] + bo_ref[...]
        xn2 = _layer_norm_f32(x1, ln2_g_ref[...], ln2_b_ref[...]).astype(jnp.bfloat16)
        h1 = jnp.dot(xn2, wfc_ref[...],
                     preferred_element_type=jnp.float32) + bfc_ref[...]
        h1 = h1 * jax.nn.sigmoid(1.702 * h1)                    # QuickGELU
        h2 = jnp.dot(h1.astype(jnp.bfloat16), wproj_ref[...],
                     preferred_element_type=jnp.float32) + bproj_ref[...]
        out_ref[...] = (x1 + h2).reshape(nb, L, D).astype(out_ref.dtype)


def _pick_batch_block(N, L, row_target=256):
    """Largest divisor of N with nb*L <= row_target, keeping >= 2 parallel steps."""
    best = 1
    for d in range(1, N + 1):
        if N % d != 0:
            continue
        if d * L > row_target:
            continue
        if N // d < 2 and N >= 2:       # keep >= 2 steps on the parallel axis (v7x)
            continue
        best = d
    return best


def _vmem_limit_bytes():
    try:
        kind = jax.devices()[0].device_kind.lower()
    except Exception:
        kind = ""
    if "v5" in kind or "v6" in kind:    # 128 MiB physical VMEM
        return 100 * 1024 * 1024
    return 64 * 1024 * 1024             # conservative elsewhere (v7x: 64 MiB / TC)


def _cost_estimate(N, L, D, H):
    flops = 2 * N * L * D * (3 * D)         # fused QKV
    flops += 4 * N * L * L * D              # scores + PV
    flops += 2 * N * L * D * D              # output projection
    flops += 2 * N * L * D * (8 * D)        # MLP (both matmuls)
    transcendentals = N * H * L * L + N * L * 4 * D
    bytes_accessed = 3 * 4 * N * L * D + 2 * 12 * D * D + 4 * 12 * D
    return pl.CostEstimate(flops=int(flops),
                           transcendentals=int(transcendentals),
                           bytes_accessed=int(bytes_accessed))


def residual_attention_block(x, kp, *, n_head, batch_block=None):
    """x: (N, L, D) f32; kp: kernel-layout params from prepare_params()."""
    N, L, D = x.shape
    hd = D // n_head
    nb = batch_block or _pick_batch_block(N, L)
    assert N % nb == 0

    def const2(a):      # grid-invariant 2-D operand (fetched once, stays resident)
        return pl.BlockSpec(a.shape, lambda n, h: (0, 0))

    def const3(a):      # grid-invariant 3-D operand
        return pl.BlockSpec(a.shape, lambda n, h: (0, 0, 0))

    in_specs = [
        pl.BlockSpec((nb, L, D), lambda n, h: (n, 0, 0)),       # x
        const2(kp["ln1_g"]), const2(kp["ln1_b"]),
        const2(kp["wqkv"]), const2(kp["bqkv"]),
        const3(kp["wo"]), const2(kp["bo"]),
        const2(kp["ln2_g"]), const2(kp["ln2_b"]),
        const2(kp["wfc"]), const2(kp["bfc"]),
        const2(kp["wproj"]), const2(kp["bproj"]),
    ]

    return pl.pallas_call(
        residual_attention_block_kernel,
        out_shape=jax.ShapeDtypeStruct((N, L, D), x.dtype),
        grid_spec=pltpu.PrefetchScalarGridSpec(
            num_scalar_prefetch=0,
            grid=(N // nb, n_head),
            in_specs=in_specs,
            out_specs=pl.BlockSpec((nb, L, D), lambda n, h: (n, 0, 0)),
            scratch_shapes=[
                pltpu.VMEM((n_head, nb * L, 3 * hd), jnp.bfloat16),  # fused QKV
                pltpu.VMEM((nb * L, D), jnp.float32),                # attn accumulator
            ],
        ),
        compiler_params=pltpu.CompilerParams(
            dimension_semantics=("parallel", "arbitrary"),
            vmem_limit_bytes=_vmem_limit_bytes(),
        ),
        cost_estimate=_cost_estimate(N, L, D, n_head),
    )(
        x,
        kp["ln1_g"], kp["ln1_b"],
        kp["wqkv"], kp["bqkv"],
        kp["wo"], kp["bo"],
        kp["ln2_g"], kp["ln2_b"],
        kp["wfc"], kp["bfc"], kp["wproj"], kp["bproj"],
    )


def transformer_forward(x, layers_kernel_params, n_head):
    for kp in layers_kernel_params:
        x = residual_attention_block(x, kp, n_head=n_head)
    return x


def prepare_params(raw, n_head, compute_dtype=jnp.bfloat16):
    """One-time host-side re-layout of PyTorch-convention params for the kernel."""
    D = raw["wo"].shape[0]
    hd = D // n_head
    assert n_head * hd == D
    scale = 1.0 / math.sqrt(hd)

    wq, wk, wv = raw["wqkv"][:D], raw["wqkv"][D:2 * D], raw["wqkv"][2 * D:]
    bq, bk, bv = raw["bqkv"][0, :D], raw["bqkv"][0, D:2 * D], raw["bqkv"][0, 2 * D:]

    def cols_by_head(w):            # (D_out, D_in) -> (D_in, H, hd)
        return jnp.transpose(w, (1, 0)).reshape(D, n_head, hd)

    # Head-blocked column order [q|k|v] per head; 1/sqrt(hd) folded into q.
    wqkv = jnp.concatenate(
        [cols_by_head(wq) * scale, cols_by_head(wk), cols_by_head(wv)], axis=-1
    ).reshape(D, 3 * D)
    bqkv = jnp.concatenate(
        [(bq * scale).reshape(n_head, hd), bk.reshape(n_head, hd),
         bv.reshape(n_head, hd)], axis=-1
    ).reshape(1, 3 * D)

    return {
        "ln1_g": raw["ln1_g"].astype(jnp.float32),
        "ln1_b": raw["ln1_b"].astype(jnp.float32),
        "wqkv": wqkv.astype(compute_dtype),
        "bqkv": bqkv.astype(jnp.float32),
        "wo": jnp.transpose(raw["wo"], (1, 0)).reshape(n_head, hd, D).astype(compute_dtype),
        "bo": raw["bo"].astype(jnp.float32),
        "ln2_g": raw["ln2_g"].astype(jnp.float32),
        "ln2_b": raw["ln2_b"].astype(jnp.float32),
        "wfc": jnp.transpose(raw["wfc"], (1, 0)).astype(compute_dtype),       # (D, 4D)
        "bfc": raw["bfc"].astype(jnp.float32),
        "wproj": jnp.transpose(raw["wproj"], (1, 0)).astype(compute_dtype),   # (4D, D)
        "bproj": raw["bproj"].astype(jnp.float32),
    }


def reference_block(x, p, n_head):
    """Plain JAX f32 reference of the PyTorch ResidualAttentionBlock forward."""
    N, L, D = x.shape
    hd = D // n_head
    scale = 1.0 / math.sqrt(hd)

    def ln(v, g, b, eps=1e-5):
        mu = jnp.mean(v, axis=-1, keepdims=True)
        var = jnp.mean((v - mu) ** 2, axis=-1, keepdims=True)
        return (v - mu) / jnp.sqrt(var + eps) * g[0] + b[0]

    xn1 = ln(x, p["ln1_g"], p["ln1_b"])
    qkv = xn1 @ p["wqkv"].T + p["bqkv"][0]
    q, k, v = jnp.split(qkv, 3, axis=-1)
    q = q.reshape(N, L, n_head, hd).transpose(0, 2, 1, 3) * scale
    k = k.reshape(N, L, n_head, hd).transpose(0, 2, 1, 3)
    v = v.reshape(N, L, n_head, hd).transpose(0, 2, 1, 3)
    s = jnp.einsum("nhqd,nhkd->nhqk", q, k)
    pr = jax.nn.softmax(s, axis=-1)
    o = jnp.einsum("nhqk,nhkd->nhqd", pr, v)
    o = o.transpose(0, 2, 1, 3).reshape(N, L, D)
    attn = o @ p["wo"].T + p["bo"][0]
    x1 = x + attn
    xn2 = ln(x1, p["ln2_g"], p["ln2_b"])
    h1 = xn2 @ p["wfc"].T + p["bfc"][0]
    h1 = h1 * jax.nn.sigmoid(1.702 * h1)
    h2 = h1 @ p["wproj"].T + p["bproj"][0]
    return x1 + h2


def reference_transformer(x, layers_raw, n_head):
    for p in layers_raw:
        x = reference_block(x, p, n_head)
    return x


def init_params(key, d_model):
    ks = jax.random.split(key, 6)
    D = d_model
    s = 0.05
    return {
        "ln1_g": jnp.ones((1, D), jnp.float32),
        "ln1_b": jnp.zeros((1, D), jnp.float32),
        "wqkv": s * jax.random.normal(ks[0], (3 * D, D), jnp.float32),
        "bqkv": s * jax.random.normal(ks[1], (1, 3 * D), jnp.float32),
        "wo": s * jax.random.normal(ks[2], (D, D), jnp.float32),
        "bo": jnp.zeros((1, D), jnp.float32),
        "ln2_g": jnp.ones((1, D), jnp.float32),
        "ln2_b": jnp.zeros((1, D), jnp.float32),
        "wfc": s * jax.random.normal(ks[3], (4 * D, D), jnp.float32),
        "bfc": s * jax.random.normal(ks[4], (1, 4 * D), jnp.float32),
        "wproj": s * jax.random.normal(ks[5], (D, 4 * D), jnp.float32),
        "bproj": jnp.zeros((1, D), jnp.float32),
    }


if __name__ == "__main__":
    # Transformer(width=32, layers=2, heads=4) on (batch=2, seq=8, d_model=32).
    N, L, D, H, LAYERS = 2, 8, 32, 4, 2
    key = jax.random.PRNGKey(0)
    kx, kp = jax.random.split(key)
    x = jax.random.normal(kx, (N, L, D), jnp.float32)

    layer_keys = jax.random.split(kp, LAYERS)
    raw_layers = [init_params(k, D) for k in layer_keys]
    kernel_layers = [prepare_params(p, H) for p in raw_layers]

    out = transformer_forward(x, kernel_layers, H)
    out = jax.block_until_ready(out)

    ref = reference_transformer(x, raw_layers, H)
    assert out.shape == (N, L, D)
    # bf16 MXU inputs vs f32 reference -> loosened tolerance.
    assert jnp.allclose(out, ref, atol=5e-2, rtol=5e-2), "mismatch vs reference"

    print("KERNEL_OK")
</pallas_src>

<mosaic_0001>
module attributes {stable_mosaic.version = 11 : i64} {
  func.func @residual_attention_block_kernel(%arg0: i32, %arg1: i32, %arg2: memref<1x8x32xf32, #tpu.memory_space<vmem>>, %arg3: memref<1x32xf32, #tpu.memory_space<vmem>>, %arg4: memref<1x32xf32, #tpu.memory_space<vmem>>, %arg5: memref<32x96xbf16, #tpu.memory_space<vmem>>, %arg6: memref<1x96xf32, #tpu.memory_space<vmem>>, %arg7: memref<4x8x32xbf16, #tpu.memory_space<vmem>>, %arg8: memref<1x32xf32, #tpu.memory_space<vmem>>, %arg9: memref<1x32xf32, #tpu.memory_space<vmem>>, %arg10: memref<1x32xf32, #tpu.memory_space<vmem>>, %arg11: memref<32x128xbf16, #tpu.memory_space<vmem>>, %arg12: memref<1x128xf32, #tpu.memory_space<vmem>>, %arg13: memref<128x32xbf16, #tpu.memory_space<vmem>>, %arg14: memref<1x32xf32, #tpu.memory_space<vmem>>, %arg15: memref<1x8x32xf32, #tpu.memory_space<vmem>>, %arg16: memref<4x8x24xbf16, #tpu.memory_space<vmem>>, %arg17: memref<8x32xf32, #tpu.memory_space<vmem>>) attributes {dimension_semantics = [#tpu.dimension_semantics<parallel>, #tpu.dimension_semantics<arbitrary>], iteration_bounds = array<i64: 2, 4>, scalar_prefetch = 0 : i64, scratch_operands = 2 : i64, tpu.core_type = #tpu.core_type<tc>, window_params = [{transform_indices = @transform_0, window_bounds = array<i64: 1, 8, 32>}, {pipeline_mode = #tpu.pipeline_mode<synchronous>, transform_indices = @transform_1, window_bounds = array<i64: 1, 32>}, {pipeline_mode = #tpu.pipeline_mode<synchronous>, transform_indices = @transform_2, window_bounds = array<i64: 1, 32>}, {pipeline_mode = #tpu.pipeline_mode<synchronous>, transform_indices = @transform_3, window_bounds = array<i64: 32, 96>}, {pipeline_mode = #tpu.pipeline_mode<synchronous>, transform_indices = @transform_4, window_bounds = array<i64: 1, 96>}, {pipeline_mode = #tpu.pipeline_mode<synchronous>, transform_indices = @transform_5, window_bounds = array<i64: 4, 8, 32>}, {pipeline_mode = #tpu.pipeline_mode<synchronous>, transform_indices = @transform_6, window_bounds = array<i64: 1, 32>}, {pipeline_mode = #tpu.pipeline_mode<synchronous>, transform_indices = @transform_7, window_bounds = array<i64: 1, 32>}, {pipeline_mode = #tpu.pipeline_mode<synchronous>, transform_indices = @transform_8, window_bounds = array<i64: 1, 32>}, {pipeline_mode = #tpu.pipeline_mode<synchronous>, transform_indices = @transform_9, window_bounds = array<i64: 32, 128>}, {pipeline_mode = #tpu.pipeline_mode<synchronous>, transform_indices = @transform_10, window_bounds = array<i64: 1, 128>}, {pipeline_mode = #tpu.pipeline_mode<synchronous>, transform_indices = @transform_11, window_bounds = array<i64: 128, 32>}, {pipeline_mode = #tpu.pipeline_mode<synchronous>, transform_indices = @transform_12, window_bounds = array<i64: 1, 32>}, {transform_indices = @transform_13, window_bounds = array<i64: 1, 8, 32>}]} {
    %c0_i32 = arith.constant 0 : i32
    %0 = arith.cmpi eq, %arg1, %c0_i32 : i32
    %1 = arith.extui %0 : i1 to i32
    %c0_i32_0 = arith.constant 0 : i32
    %2 = arith.cmpi ne, %1, %c0_i32_0 : i32
    scf.if %2 {
      %c0_13 = arith.constant 0 : index
      %c0_14 = arith.constant 0 : index
      %c0_15 = arith.constant 0 : index
      %36 = vector.load %arg2[%c0_13, %c0_14, %c0_15] : memref<1x8x32xf32, #tpu.memory_space<vmem>>, vector<1x8x32xf32>
      %37 = vector.shape_cast %36 : vector<1x8x32xf32> to vector<8x32xf32>
      %c0_16 = arith.constant 0 : index
      %c0_17 = arith.constant 0 : index
      %38 = vector.load %arg3[%c0_16, %c0_17] : memref<1x32xf32, #tpu.memory_space<vmem>>, vector<1x32xf32>
      %c0_18 = arith.constant 0 : index
      %c0_19 = arith.constant 0 : index
      %39 = vector.load %arg4[%c0_18, %c0_19] : memref<1x32xf32, #tpu.memory_space<vmem>>, vector<1x32xf32>
      %cst_20 = arith.constant dense<0.000000e+00> : vector<8xf32>
      %40 = vector.multi_reduction <add>, %37, %cst_20 [1] : vector<8x32xf32> to vector<8xf32>
      %41 = vector.shape_cast %40 : vector<8xf32> to vector<8x1xf32>
      %cst_21 = arith.constant 3.200000e+01 : f32
      %42 = vector.broadcast %cst_21 : f32 to vector<8x1xf32>
      %43 = arith.divf %41, %42 : vector<8x1xf32>
      %44 = vector.broadcast %43 : vector<8x1xf32> to vector<8x32xf32>
      %45 = arith.subf %37, %44 : vector<8x32xf32>
      %46 = arith.mulf %45, %45 : vector<8x32xf32>
      %cst_22 = arith.constant dense<0.000000e+00> : vector<8xf32>
      %47 = vector.multi_reduction <add>, %46, %cst_22 [1] : vector<8x32xf32> to vector<8xf32>
      %48 = vector.shape_cast %47 : vector<8xf32> to vector<8x1xf32>
      %cst_23 = arith.constant 3.200000e+01 : f32
      %49 = vector.broadcast %cst_23 : f32 to vector<8x1xf32>
      %50 = arith.divf %48, %49 : vector<8x1xf32>
      %51 = vector.broadcast %43 : vector<8x1xf32> to vector<8x32xf32>
      %52 = arith.subf %37, %51 : vector<8x32xf32>
      %cst_24 = arith.constant 9.99999974E-6 : f32
      %53 = vector.broadcast %cst_24 : f32 to vector<8x1xf32>
      %54 = arith.addf %50, %53 : vector<8x1xf32>
      %55 = math.rsqrt %54 : vector<8x1xf32>
      %56 = vector.broadcast %55 : vector<8x1xf32> to vector<8x32xf32>
      %57 = arith.mulf %52, %56 : vector<8x32xf32>
      %58 = vector.broadcast %38 : vector<1x32xf32> to vector<8x32xf32>
      %59 = arith.mulf %57, %58 : vector<8x32xf32>
      %60 = vector.broadcast %39 : vector<1x32xf32> to vector<8x32xf32>
      %61 = arith.addf %59, %60 : vector<8x32xf32>
      %62 = arith.truncf %61 : vector<8x32xf32> to vector<8x32xbf16>
      %c0_25 = arith.constant 0 : index
      %c0_26 = arith.constant 0 : index
      %63 = vector.load %arg5[%c0_25, %c0_26] : memref<32x96xbf16, #tpu.memory_space<vmem>>, vector<32x96xbf16>
      %cst_27 = arith.constant dense<0.000000e+00> : vector<8x96xf32>
      %64 = tpu.matmul %62, %63, %cst_27 {dimension_numbers = #tpu.dot_dimension_numbers<[1], [0], [0], [1], [0, 0, 1, 1], [], []>} : vector<8x32xbf16>, vector<32x96xbf16>, vector<8x96xf32> -> vector<8x96xf32>
      %c0_28 = arith.constant 0 : index
      %c0_29 = arith.constant 0 : index
      %65 = vector.load %arg6[%c0_28, %c0_29] : memref<1x96xf32, #tpu.memory_space<vmem>>, vector<1x96xf32>
      %66 = vector.broadcast %65 : vector<1x96xf32> to vector<8x96xf32>
      %67 = arith.addf %64, %66 : vector<8x96xf32>
      %68 = arith.truncf %67 : vector<8x96xf32> to vector<8x96xbf16>
      %69 = vector.extract_strided_slice %68 {offsets = [0, 0], sizes = [8, 24], strides = [1, 1]} : vector<8x96xbf16> to vector<8x24xbf16>
      %c0_30 = arith.constant 0 : index
      %c0_31 = arith.constant 0 : index
      %c0_32 = arith.constant 0 : index
      %70 = vector.load %arg16[%c0_30, %c0_31, %c0_32] : memref<4x8x24xbf16, #tpu.memory_space<vmem>>, vector<1x8x24xbf16>
      %71 = vector.shape_cast %70 : vector<1x8x24xbf16> to vector<8x24xbf16>
      %72 = vector.shape_cast %69 : vector<8x24xbf16> to vector<1x8x24xbf16>
      tpu.vector_store %arg16[%c0_30, %c0_31, %c0_32], %72 {strides = array<i32>} : memref<4x8x24xbf16, #tpu.memory_space<vmem>>, vector<1x8x24xbf16>,
      %73 = vector.extract_strided_slice %68 {offsets = [0, 24], sizes = [8, 24], strides = [1, 1]} : vector<8x96xbf16> to vector<8x24xbf16>
      %c1 = arith.constant 1 : index
      %c0_33 = arith.constant 0 : index
      %c0_34 = arith.constant 0 : index
      %74 = vector.load %arg16[%c1, %c0_33, %c0_34] : memref<4x8x24xbf16, #tpu.memory_space<vmem>>, vector<1x8x24xbf16>
      %75 = vector.shape_cast %74 : vector<1x8x24xbf16> to vector<8x24xbf16>
      %76 = vector.shape_cast %73 : vector<8x24xbf16> to vector<1x8x24xbf16>
      tpu.vector_store %arg16[%c1, %c0_33, %c0_34], %76 {strides = array<i32>} : memref<4x8x24xbf16, #tpu.memory_space<vmem>>, vector<1x8x24xbf16>,
      %77 = vector.extract_strided_slice %68 {offsets = [0, 48], sizes = [8, 24], strides = [1, 1]} : vector<8x96xbf16> to vector<8x24xbf16>
      %c2 = arith.constant 2 : index
      %c0_35 = arith.constant 0 : index
      %c0_36 = arith.constant 0 : index
      %78 = vector.load %arg16[%c2, %c0_35, %c0_36] : memref<4x8x24xbf16, #tpu.memory_space<vmem>>, vector<1x8x24xbf16>
      %79 = vector.shape_cast %78 : vector<1x8x24xbf16> to vector<8x24xbf16>
      %80 = vector.shape_cast %77 : vector<8x24xbf16> to vector<1x8x24xbf16>
      tpu.vector_store %arg16[%c2, %c0_35, %c0_36], %80 {strides = array<i32>} : memref<4x8x24xbf16, #tpu.memory_space<vmem>>, vector<1x8x24xbf16>,
      %81 = vector.extract_strided_slice %68 {offsets = [0, 72], sizes = [8, 24], strides = [1, 1]} : vector<8x96xbf16> to vector<8x24xbf16>
      %c3 = arith.constant 3 : index
      %c0_37 = arith.constant 0 : index
      %c0_38 = arith.constant 0 : index
      %82 = vector.load %arg16[%c3, %c0_37, %c0_38] : memref<4x8x24xbf16, #tpu.memory_space<vmem>>, vector<1x8x24xbf16>
      %83 = vector.shape_cast %82 : vector<1x8x24xbf16> to vector<8x24xbf16>
      %84 = vector.shape_cast %81 : vector<8x24xbf16> to vector<1x8x24xbf16>
      tpu.vector_store %arg16[%c3, %c0_37, %c0_38], %84 {strides = array<i32>} : memref<4x8x24xbf16, #tpu.memory_space<vmem>>, vector<1x8x24xbf16>,
      %cst_39 = arith.constant 0.000000e+00 : f32
      %85 = vector.broadcast %cst_39 : f32 to vector<8x32xf32>
      %c0_40 = arith.constant 0 : index
      %c0_41 = arith.constant 0 : index
      %86 = vector.load %arg17[%c0_40, %c0_41] : memref<8x32xf32, #tpu.memory_space<vmem>>, vector<8x32xf32>
      tpu.vector_store %arg17[%c0_40, %c0_41], %85 {strides = array<i32>} : memref<8x32xf32, #tpu.memory_space<vmem>>, vector<8x32xf32>,
    } else {
    }
    %3 = arith.index_cast %arg1 : i32 to index
    %c0 = arith.constant 0 : index
    %c0_1 = arith.constant 0 : index
    %4 = vector.load %arg16[%3, %c0, %c0_1] : memref<4x8x24xbf16, #tpu.memory_space<vmem>>, vector<1x8x24xbf16>
    %5 = vector.shape_cast %4 : vector<1x8x24xbf16> to vector<8x24xbf16>
    %6 = vector.extract_strided_slice %5 {offsets = [0, 0], sizes = [8, 8], strides = [1, 1]} : vector<8x24xbf16> to vector<8x8xbf16>
    %7 = vector.shape_cast %6 : vector<8x8xbf16> to vector<1x8x8xbf16>
    %8 = vector.extract_strided_slice %5 {offsets = [0, 8], sizes = [8, 8], strides = [1, 1]} : vector<8x24xbf16> to vector<8x8xbf16>
    %9 = vector.shape_cast %8 : vector<8x8xbf16> to vector<1x8x8xbf16>
    %10 = vector.extract_strided_slice %5 {offsets = [0, 16], sizes = [8, 8], strides = [1, 1]} : vector<8x24xbf16> to vector<8x8xbf16>
    %11 = vector.shape_cast %10 : vector<8x8xbf16> to vector<1x8x8xbf16>
    "tpu.trace_start"() <{level = 10 : i32, message = "nqd,nkd->nqk"}> : () -> ()
    %cst = arith.constant dense<0.000000e+00> : vector<1x8x8xf32>
    %12 = tpu.matmul %7, %9, %cst {dimension_numbers = #tpu.dot_dimension_numbers<[2], [2], [1], [1], [0, 0, 0, 1, 1, 1], [0], [0]>} : vector<1x8x8xbf16>, vector<1x8x8xbf16>, vector<1x8x8xf32> -> vector<1x8x8xf32>
    "tpu.trace_stop"() : () -> ()
    %cst_2 = arith.constant dense<0xFF800000> : vector<1x8xf32>
    %13 = vector.multi_reduction <maximumf>, %12, %cst_2 [2] : vector<1x8x8xf32> to vector<1x8xf32>
    %14 = vector.shape_cast %13 : vector<1x8xf32> to vector<1x8x1xf32>
    %15 = vector.broadcast %14 : vector<1x8x1xf32> to vector<1x8x8xf32>
    %16 = arith.subf %12, %15 : vector<1x8x8xf32>
    %17 = math.exp %16 : vector<1x8x8xf32>
    %cst_3 = arith.constant dense<0.000000e+00> : vector<1x8xf32>
    %18 = vector.multi_reduction <add>, %17, %cst_3 [2] : vector<1x8x8xf32> to vector<1x8xf32>
    %19 = vector.shape_cast %18 : vector<1x8xf32> to vector<1x8x1xf32>
    %20 = vector.broadcast %19 : vector<1x8x1xf32> to vector<1x8x8xf32>
    %21 = arith.divf %17, %20 : vector<1x8x8xf32>
    %22 = arith.truncf %21 : vector<1x8x8xf32> to vector<1x8x8xbf16>
    "tpu.trace_start"() <{level = 10 : i32, message = "nqk,nkd->nqd"}> : () -> ()
    %cst_4 = arith.constant dense<0.000000e+00> : vector<1x8x8xf32>
    %23 = tpu.matmul %22, %11, %cst_4 {dimension_numbers = #tpu.dot_dimension_numbers<[2], [1], [1], [2], [0, 0, 0, 1, 1, 2], [0], [0]>} : vector<1x8x8xbf16>, vector<1x8x8xbf16>, vector<1x8x8xf32> -> vector<1x8x8xf32>
    "tpu.trace_stop"() : () -> ()
    %c0_5 = arith.constant 0 : index
    %c0_6 = arith.constant 0 : index
    %24 = vector.load %arg17[%c0_5, %c0_6] : memref<8x32xf32, #tpu.memory_space<vmem>>, vector<8x32xf32>
    %25 = vector.shape_cast %23 : vector<1x8x8xf32> to vector<8x8xf32>
    %26 = arith.truncf %25 : vector<8x8xf32> to vector<8x8xbf16>
    %27 = arith.index_cast %arg1 : i32 to index
    %c0_7 = arith.constant 0 : index
    %c0_8 = arith.constant 0 : index
    %28 = vector.load %arg7[%27, %c0_7, %c0_8] : memref<4x8x32xbf16, #tpu.memory_space<vmem>>, vector<1x8x32xbf16>
    %29 = vector.shape_cast %28 : vector<1x8x32xbf16> to vector<8x32xbf16>
    %cst_9 = arith.constant dense<0.000000e+00> : vector<8x32xf32>
    %30 = tpu.matmul %26, %29, %cst_9 {dimension_numbers = #tpu.dot_dimension_numbers<[1], [0], [0], [1], [0, 0, 1, 1], [], []>} : vector<8x8xbf16>, vector<8x32xbf16>, vector<8x32xf32> -> vector<8x32xf32>
    %31 = arith.addf %24, %30 : vector<8x32xf32>
    %c0_10 = arith.constant 0 : index
    %c0_11 = arith.constant 0 : index
    %32 = vector.load %arg17[%c0_10, %c0_11] : memref<8x32xf32, #tpu.memory_space<vmem>>, vector<8x32xf32>
    tpu.vector_store %arg17[%c0_10, %c0_11], %31 {strides = array<i32>} : memref<8x32xf32, #tpu.memory_space<vmem>>, vector<8x32xf32>,
    %c3_i32 = arith.constant 3 : i32
    %33 = arith.cmpi eq, %arg1, %c3_i32 : i32
    %34 = arith.extui %33 : i1 to i32
    %c0_i32_12 = arith.constant 0 : i32
    %35 = arith.cmpi ne, %34, %c0_i32_12 : i32
    scf.if %35 {
      %c0_13 = arith.constant 0 : index
      %c0_14 = arith.constant 0 : index
      %c0_15 = arith.constant 0 : index
      %36 = vector.load %arg2[%c0_13, %c0_14, %c0_15] : memref<1x8x32xf32, #tpu.memory_space<vmem>>, vector<1x8x32xf32>
      %37 = vector.shape_cast %36 : vector<1x8x32xf32> to vector<8x32xf32>
      %c0_16 = arith.constant 0 : index
      %c0_17 = arith.constant 0 : index
      %38 = vector.load %arg17[%c0_16, %c0_17] : memref<8x32xf32, #tpu.memory_space<vmem>>, vector<8x32xf32>
      %39 = arith.addf %37, %38 : vector<8x32xf32>
      %c0_18 = arith.constant 0 : index
      %c0_19 = arith.constant 0 : index
      %40 = vector.load %arg8[%c0_18, %c0_19] : memref<1x32xf32, #tpu.memory_space<vmem>>, vector<1x32xf32>
      %41 = vector.broadcast %40 : vector<1x32xf32> to vector<8x32xf32>
      %42 = arith.addf %39, %41 : vector<8x32xf32>
      %c0_20 = arith.constant 0 : index
      %c0_21 = arith.constant 0 : index
      %43 = vector.load %arg9[%c0_20, %c0_21] : memref<1x32xf32, #tpu.memory_space<vmem>>, vector<1x32xf32>
      %c0_22 = arith.constant 0 : index
      %c0_23 = arith.constant 0 : index
      %44 = vector.load %arg10[%c0_22, %c0_23] : memref<1x32xf32, #tpu.memory_space<vmem>>, vector<1x32xf32>
      %cst_24 = arith.constant dense<0.000000e+00> : vector<8xf32>
      %45 = vector.multi_reduction <add>, %42, %cst_24 [1] : vector<8x32xf32> to vector<8xf32>
      %46 = vector.shape_cast %45 : vector<8xf32> to vector<8x1xf32>
      %cst_25 = arith.constant 3.200000e+01 : f32
      %47 = vector.broadcast %cst_25 : f32 to vector<8x1xf32>
      %48 = arith.divf %46, %47 : vector<8x1xf32>
      %49 = vector.broadcast %48 : vector<8x1xf32> to vector<8x32xf32>
      %50 = arith.subf %42, %49 : vector<8x32xf32>
      %51 = arith.mulf %50, %50 : vector<8x32xf32>
      %cst_26 = arith.constant dense<0.000000e+00> : vector<8xf32>
      %52 = vector.multi_reduction <add>, %51, %cst_26 [1] : vector<8x32xf32> to vector<8xf32>
      %53 = vector.shape_cast %52 : vector<8xf32> to vector<8x1xf32>
      %cst_27 = arith.constant 3.200000e+01 : f32
      %54 = vector.broadcast %cst_27 : f32 to vector<8x1xf32>
      %55 = arith.divf %53, %54 : vector<8x1xf32>
      %56 = vector.broadcast %48 : vector<8x1xf32> to vector<8x32xf32>
      %57 = arith.subf %42, %56 : vector<8x32xf32>
      %cst_28 = arith.constant 9.99999974E-6 : f32
      %58 = vector.broadcast %cst_28 : f32 to vector<8x1xf32>
      %59 = arith.addf %55, %58 : vector<8x1xf32>
      %60 = math.rsqrt %59 : vector<8x1xf32>
      %61 = vector.broadcast %60 : vector<8x1xf32> to vector<8x32xf32>
      %62 = arith.mulf %57, %61 : vector<8x32xf32>
      %63 = vector.broadcast %43 : vector<1x32xf32> to vector<8x32xf32>
      %64 = arith.mulf %62, %63 : vector<8x32xf32>
      %65 = vector.broadcast %44 : vector<1x32xf32> to vector<8x32xf32>
      %66 = arith.addf %64, %65 : vector<8x32xf32>
      %67 = arith.truncf %66 : vector<8x32xf32> to vector<8x32xbf16>
      %c0_29 = arith.constant 0 : index
      %c0_30 = arith.constant 0 : index
      %68 = vector.load %arg11[%c0_29, %c0_30] : memref<32x128xbf16, #tpu.memory_space<vmem>>, vector<32x128xbf16>
      %cst_31 = arith.constant dense<0.000000e+00> : vector<8x128xf32>
      %69 = tpu.matmul %67, %68, %cst_31 {dimension_numbers = #tpu.dot_dimension_numbers<[1], [0], [0], [1], [0, 0, 1, 1], [], []>} : vector<8x32xbf16>, vector<32x128xbf16>, vector<8x128xf32> -> vector<8x128xf32>
      %c0_32 = arith.constant 0 : index
      %c0_33 = arith.constant 0 : index
      %70 = vector.load %arg12[%c0_32, %c0_33] : memref<1x128xf32, #tpu.memory_space<vmem>>, vector<1x128xf32>
      %71 = vector.broadcast %70 : vector<1x128xf32> to vector<8x128xf32>
      %72 = arith.addf %69, %71 : vector<8x128xf32>
      %cst_34 = arith.constant 1.702000e+00 : f32
      %73 = vector.broadcast %cst_34 : f32 to vector<8x128xf32>
      %74 = arith.mulf %73, %72 : vector<8x128xf32>
      %75 = arith.negf %74 : vector<8x128xf32>
      %76 = math.exp %75 : vector<8x128xf32>
      %cst_35 = arith.constant 1.000000e+00 : f32
      %77 = vector.broadcast %cst_35 : f32 to vector<8x128xf32>
      %78 = arith.addf %77, %76 : vector<8x128xf32>
      %79 = arith.divf %77, %78 : vector<8x128xf32>
      %80 = arith.mulf %72, %79 : vector<8x128xf32>
      %81 = arith.truncf %80 : vector<8x128xf32> to vector<8x128xbf16>
      %c0_36 = arith.constant 0 : index
      %c0_37 = arith.constant 0 : index
      %82 = vector.load %arg13[%c0_36, %c0_37] : memref<128x32xbf16, #tpu.memory_space<vmem>>, vector<128x32xbf16>
      %cst_38 = arith.constant dense<0.000000e+00> : vector<8x32xf32>
      %83 = tpu.matmul %81, %82, %cst_38 {dimension_numbers = #tpu.dot_dimension_numbers<[1], [0], [0], [1], [0, 0, 1, 1], [], []>} : vector<8x128xbf16>, vector<128x32xbf16>, vector<8x32xf32> -> vector<8x32xf32>
      %c0_39 = arith.constant 0 : index
      %c0_40 = arith.constant 0 : index
      %84 = vector.load %arg14[%c0_39, %c0_40] : memref<1x32xf32, #tpu.memory_space<vmem>>, vector<1x32xf32>
      %85 = vector.broadcast %84 : vector<1x32xf32> to vector<8x32xf32>
      %86 = arith.addf %83, %85 : vector<8x32xf32>
      %87 = arith.addf %42, %86 : vector<8x32xf32>
      %88 = vector.shape_cast %87 : vector<8x32xf32> to vector<1x8x32xf32>
      %c0_41 = arith.constant 0 : index
      %c0_42 = arith.constant 0 : index
      %c0_43 = arith.constant 0 : index
      %89 = vector.load %arg15[%c0_41, %c0_42, %c0_43] : memref<1x8x32xf32, #tpu.memory_space<vmem>>, vector<1x8x32xf32>
      tpu.vector_store %arg15[%c0_41, %c0_42, %c0_43], %88 {strides = array<i32>} : memref<1x8x32xf32, #tpu.memory_space<vmem>>, vector<1x8x32xf32>,
    } else {
    }
    return
  }
  func.func @transform_0(%arg0: i32, %arg1: i32) -> (i32, i32, i32) {
    %c0_i32 = arith.constant 0 : i32
    %c0_i32_0 = arith.constant 0 : i32
    %c0_i32_1 = arith.constant 0 : i32
    return %arg0, %c0_i32, %c0_i32_0 : i32, i32, i32
  }
  func.func @transform_1(%arg0: i32, %arg1: i32) -> (i32, i32) {
    %c0_i32 = arith.constant 0 : i32
    %c0_i32_0 = arith.constant 0 : i32
    %c0_i32_1 = arith.constant 0 : i32
    return %c0_i32, %c0_i32_0 : i32, i32
  }
  func.func @transform_2(%arg0: i32, %arg1: i32) -> (i32, i32) {
    %c0_i32 = arith.constant 0 : i32
    %c0_i32_0 = arith.constant 0 : i32
    %c0_i32_1 = arith.constant 0 : i32
    return %c0_i32, %c0_i32_0 : i32, i32
  }
  func.func @transform_3(%arg0: i32, %arg1: i32) -> (i32, i32) {
    %c0_i32 = arith.constant 0 : i32
    %c0_i32_0 = arith.constant 0 : i32
    %c0_i32_1 = arith.constant 0 : i32
    return %c0_i32, %c0_i32_0 : i32, i32
  }
  func.func @transform_4(%arg0: i32, %arg1: i32) -> (i32, i32) {
    %c0_i32 = arith.constant 0 : i32
    %c0_i32_0 = arith.constant 0 : i32
    %c0_i32_1 = arith.constant 0 : i32
    return %c0_i32, %c0_i32_0 : i32, i32
  }
  func.func @transform_5(%arg0: i32, %arg1: i32) -> (i32, i32, i32) {
    %c0_i32 = arith.constant 0 : i32
    %c0_i32_0 = arith.constant 0 : i32
    %c0_i32_1 = arith.constant 0 : i32
    %c0_i32_2 = arith.constant 0 : i32
    return %c0_i32, %c0_i32_0, %c0_i32_1 : i32, i32, i32
  }
  func.func @transform_6(%arg0: i32, %arg1: i32) -> (i32, i32) {
    %c0_i32 = arith.constant 0 : i32
    %c0_i32_0 = arith.constant 0 : i32
    %c0_i32_1 = arith.constant 0 : i32
    return %c0_i32, %c0_i32_0 : i32, i32
  }
  func.func @transform_7(%arg0: i32, %arg1: i32) -> (i32, i32) {
    %c0_i32 = arith.constant 0 : i32
    %c0_i32_0 = arith.constant 0 : i32
    %c0_i32_1 = arith.constant 0 : i32
    return %c0_i32, %c0_i32_0 : i32, i32
  }
  func.func @transform_8(%arg0: i32, %arg1: i32) -> (i32, i32) {
    %c0_i32 = arith.constant 0 : i32
    %c0_i32_0 = arith.constant 0 : i32
    %c0_i32_1 = arith.constant 0 : i32
    return %c0_i32, %c0_i32_0 : i32, i32
  }
  func.func @transform_9(%arg0: i32, %arg1: i32) -> (i32, i32) {
    %c0_i32 = arith.constant 0 : i32
    %c0_i32_0 = arith.constant 0 : i32
    %c0_i32_1 = arith.constant 0 : i32
    return %c0_i32, %c0_i32_0 : i32, i32
  }
  func.func @transform_10(%arg0: i32, %arg1: i32) -> (i32, i32) {
    %c0_i32 = arith.constant 0 : i32
    %c0_i32_0 = arith.constant 0 : i32
    %c0_i32_1 = arith.constant 0 : i32
    return %c0_i32, %c0_i32_0 : i32, i32
  }
  func.func @transform_11(%arg0: i32, %arg1: i32) -> (i32, i32) {
    %c0_i32 = arith.constant 0 : i32
    %c0_i32_0 = arith.constant 0 : i32
    %c0_i32_1 = arith.constant 0 : i32
    return %c0_i32, %c0_i32_0 : i32, i32
  }
  func.func @transform_12(%arg0: i32, %arg1: i32) -> (i32, i32) {
    %c0_i32 = arith.constant 0 : i32
    %c0_i32_0 = arith.constant 0 : i32
    %c0_i32_1 = arith.constant 0 : i32
    return %c0_i32, %c0_i32_0 : i32, i32
  }
  func.func @transform_13(%arg0: i32, %arg1: i32) -> (i32, i32, i32) {
    %c0_i32 = arith.constant 0 : i32
    %c0_i32_0 = arith.constant 0 : i32
    %c0_i32_1 = arith.constant 0 : i32
    return %arg0, %c0_i32, %c0_i32_0 : i32, i32, i32
  }
}

</mosaic_0001>

<llo_original>
// kernel: tpu_custom_call.1
$region0: #{tpu_custom_call.1}
  #allocation0 [shape = 'u32[]', space=smem, size = 0x4, offset = 0x4, fixed_abs, tag = 'smem constant byte address 0x4 - core index']
  #allocation1 [shape = 'u32[144,128]{1,0:T(1,128)}', space=vmem, size = 0x12000, scoped, tag = 'internal scratch']
  #allocation2 [shape = 'bf16[4,8,24]{2,1,0:T(8,128)(2,1)}', space=vmem, size = 0x2000, scoped, tag = 'scratch operand']
  #allocation3 [shape = 'f32[8,32]{1,0:T(8,128)}', space=vmem, size = 0x1000, scoped, tag = 'scratch operand']
  %s0 = inlined_call_operand.hbm [shape: f32[2,8,32], index: 0, kind: input, shape index: {}]
  %s1 = inlined_call_operand.hbm [shape: f32[1,32], index: 1, kind: input, shape index: {}]
  %s2 = inlined_call_operand.hbm [shape: f32[1,32], index: 2, kind: input, shape index: {}]
  %s3 = inlined_call_operand.hbm [shape: bf16[32,96], index: 3, kind: input, shape index: {}]
  %s4 = inlined_call_operand.hbm [shape: f32[1,96], index: 4, kind: input, shape index: {}]
  %s5 = inlined_call_operand.hbm [shape: bf16[4,8,32], index: 5, kind: input, shape index: {}]
  %s6 = inlined_call_operand.hbm [shape: f32[1,32], index: 6, kind: input, shape index: {}]
  %s7 = inlined_call_operand.hbm [shape: f32[1,32], index: 7, kind: input, shape index: {}]
  %s8 = inlined_call_operand.hbm [shape: f32[1,32], index: 8, kind: input, shape index: {}]
  %s9 = inlined_call_operand.hbm [shape: bf16[32,128], index: 9, kind: input, shape index: {}]
  %s10 = inlined_call_operand.hbm [shape: f32[1,128], index: 10, kind: input, shape index: {}]
  %s11 = inlined_call_operand.hbm [shape: bf16[128,32], index: 11, kind: input, shape index: {}]
  %s12 = inlined_call_operand.hbm [shape: f32[1,32], index: 12, kind: input, shape index: {}]
  %s13 = inlined_call_operand.hbm [shape: f32[2,8,32], index: 13, kind: output, shape index: {}]
  %s14 = sld [smem:[#allocation0]]
  $region145: #{tpu_custom_call.1} parent=0
    _
  %s16 = ssub.s32 1, %s14
  %s17 = scalar_select 0, %s16, %s14
  $region1: #{tpu_custom_call.1} parent=0
    #allocation4 [shape = 'u8[8192]{0}', space=vmem, size = 0x2000, scoped, tag = 'input window, operand 0']
    #allocation5 [shape = 's32[2]{0}', space=sflag, size = 0x8, scoped, tag = 'scoped memory for tpu_custom_call.1']
    #allocation6 [shape = 's32[2]{0}', space=sflag, size = 0x8, scoped, tag = 'scoped memory for tpu_custom_call.1']
    #allocation7 [shape = 'u8[512]{0}', space=vmem, size = 0x400, scoped, tag = 'input window, operand 1, single buffered']
    #allocation8 [shape = 's32[1]{0}', space=sflag, size = 0x4, scoped, tag = 'scoped memory for tpu_custom_call.1']
    #allocation9 [shape = 'u8[512]{0}', space=vmem, size = 0x400, scoped, tag = 'input window, operand 2, single buffered']
    #allocation10 [shape = 'u8[8192]{0}', space=vmem, size = 0x2000, scoped, tag = 'input window, operand 3, single buffered']
    #allocation11 [shape = 's32[1]{0}', space=sflag, size = 0x4, scoped, tag = 'scoped memory for tpu_custom_call.1']
    #allocation12 [shape = 'u8[512]{0}', space=vmem, size = 0x400, scoped, tag = 'input window, operand 4, single buffered']
    #allocation13 [shape = 'u8[8192]{0}', space=vmem, size = 0x2000, scoped, tag = 'input window, operand 5, single buffered']
    #allocation14 [shape = 's32[1]{0}', space=sflag, size = 0x4, scoped, tag = 'scoped memory for tpu_custom_call.1']
    #allocation15 [shape = 'u8[512]{0}', space=vmem, size = 0x400, scoped, tag = 'input window, operand 6, single buffered']
    #allocation16 [shape = 'u8[512]{0}', space=vmem, size = 0x400, scoped, tag = 'input window, operand 7, single buffered']
    #allocation17 [shape = 's32[1]{0}', space=sflag, size = 0x4, scoped, tag = 'scoped memory for tpu_custom_call.1']
    #allocation18 [shape = 'u8[512]{0}', space=vmem, size = 0x400, scoped, tag = 'input window, operand 8, single buffered']
    #allocation19 [shape = 'u8[8192]{0}', space=vmem, size = 0x2000, scoped, tag = 'input window, operand 9, single buffered']
    #allocation20 [shape = 's32[1]{0}', space=sflag, size = 0x4, scoped, tag = 'scoped memory for tpu_custom_call.1']
    #allocation21 [shape = 'u8[512]{0}', space=vmem, size = 0x400, scoped, tag = 'input window, operand 10, single buffered']
    #allocation22 [shape = 'u8[32768]{0}', space=vmem, size = 0x8000, scoped, tag = 'input window, operand 11, single buffered']
    #allocation23 [shape = 's32[1]{0}', space=sflag, size = 0x4, scoped, tag = 'scoped memory for tpu_custom_call.1']
    #allocation24 [shape = 'u8[512]{0}', space=vmem, size = 0x400, scoped, tag = 'input window, operand 12, single buffered']
    #allocation25 [shape = 'u8[8192]{0}', space=vmem, size = 0x2000, scoped, tag = 'output window, operand 0']
    %18 = vsyncpa [#allocation5], 0
    %s19 = scalar_lea.sflag [#allocation5], 1
    %20 = vsyncpa %s19, 0
    %21 = vsyncpa [#allocation8], 0
    %22 = vsyncpa [#allocation11], 0
    %23 = vsyncpa [#allocation14], 0
    %24 = vsyncpa [#allocation17], 0
    %25 = vsyncpa [#allocation20], 0
    %26 = vsyncpa [#allocation23], 0
    %27 = vsyncpa [#allocation6], 0
    %s28 = scalar_lea.sflag [#allocation6], 1
    %29 = vsyncpa %s28, 0
    loop: start=0, step=1, limit=10
    $region2: #{tpu_custom_call.1} parent=1 // loop_pre_header
      _
    $region3: #{tpu_custom_call.1} parent=1 // loop_header
      %s31 = sphi 0, %s35
      %p32 = scmp.ge.s32.totalorder %s31, 10
      %s38 = sphi 0, %s50
      %s39 = sphi 0, %s46
      %s40 = sphi 0, %s38
      %s41 = sphi 0, %s39
      %s42 = sphi 0, %s40
      %s43 = sphi 0, %s41
      %s53 = sphi 0, %s55
      %s56 = sphi 0, %s53
      %s57 = sphi 0, %s56
      %s73 = sphi 0, %s57
      %s77 = sphi 0, %s77
      %s79 = sphi 0, %s77
      %s80 = sphi 0, %s79
      %s94 = sphi 0, %s80
      %s98 = sphi 0, %s98
      %s100 = sphi 0, %s98
      %s101 = sphi 0, %s100
      %s115 = sphi 0, %s101
      %s119 = sphi 0, %s119
      %s121 = sphi 0, %s119
      %s122 = sphi 0, %s121
      %s136 = sphi 0, %s122
      %s140 = sphi 0, %s140
      %s142 = sphi 0, %s140
      %s143 = sphi 0, %s142
      %s157 = sphi 0, %s143
      %s161 = sphi 0, %s161
      %s163 = sphi 0, %s161
      %s164 = sphi 0, %s163
      %s178 = sphi 0, %s164
      %s182 = sphi 0, %s182
      %s184 = sphi 0, %s182
      %s185 = sphi 0, %s184
      %s199 = sphi 0, %s185
      %s203 = sphi 0, %s203
      %s205 = sphi 0, %s203
      %s206 = sphi 0, %s205
      %s220 = sphi 0, %s206
      %s224 = sphi 0, %s224
      %s226 = sphi 0, %s224
      %s227 = sphi 0, %s226
      %s241 = sphi 0, %s227
      %s245 = sphi 0, %s245
      %s247 = sphi 0, %s245
      %s248 = sphi 0, %s247
      %s262 = sphi 0, %s248
      %s266 = sphi 0, %s266
      %s268 = sphi 0, %s266
      %s269 = sphi 0, %s268
      %s283 = sphi 0, %s269
      %s287 = sphi 0, %s287
      %s289 = sphi 0, %s287
      %s290 = sphi 0, %s289
      %s304 = sphi 0, %s290
      %s308 = sphi 0, %s308
      %s310 = sphi 0, %s308
      %s311 = sphi 0, %s310
      %s325 = sphi 0, %s311
      %s331 = sphi 0, %s333
      %s334 = sphi 0, %s331
      %s335 = sphi 0, %s334
      %s351 = sphi 0, %s335
    $region4: #{tpu_custom_call.1} parent=1 // loop_header_branch
      %34 = sbr.rel (%p32) target = $region8
    $region5: #{tpu_custom_call.1} parent=1 // loop_body
      %s36 = ssub.s32 %s31, 1
      %s37 = ssub.s32 %s31, 2
      %s44 = sadd.s32 1, %s39
      %p45 = scmp.ge.s32.totalorder %s44, 4
      %s46 = scalar_select %p45, 0, %s44
      %s47 = sadd.s32 1, %s38
      %s48 = scalar_select %p45, %s47, %s38
      %p49 = scmp.ge.s32.totalorder %s48, 2
      %s50 = scalar_select %p49, 0, %s48
      %s51 = ssub.s32 %s38, %s50
      %p52 = scmp.eq.s32.totalorder %s51, 0
      %s54 = sadd.s32 %s53, 1
      %s55 = scalar_select %p52, %s53, %s54
      %p58 = pneg %p52
      %p59 = scmp.eq.s32.totalorder %s31, 7
      %p60 = por %p58, %p59
      %p61 = scmp.ne.s32.totalorder %s53, %s56
      %p62 = scmp.eq.s32.totalorder %s31, 0
      %p63 = por %p61, %p62
      %p64 = scmp.ne.s32.totalorder %s53, %s56
      %p65 = scmp.eq.s32.totalorder %s36, 7
      %p66 = por %p64, %p65
      %p67 = scmp.ne.s32.totalorder %s56, %s57
      %p68 = scmp.eq.s32.totalorder %s36, 0
      %p69 = por %p67, %p68
      %p70 = scmp.ne.s32.totalorder %s56, %s57
      %p71 = scmp.eq.s32.totalorder %s37, 7
      %p72 = por %p70, %p71
      %p74 = scmp.ne.s32.totalorder %s57, %s73
      %p75 = scmp.eq.s32.totalorder %s37, 0
      %p76 = por %p74, %p75
      %s78 = sadd.s32 %s77, 1
      %p81 = scmp.eq.s32.totalorder %s31, 7
      %p82 = scmp.ne.s32.totalorder %s77, %s79
      %p83 = scmp.eq.s32.totalorder %s31, 0
      %p84 = por %p82, %p83
      %p85 = scmp.ne.s32.totalorder %s77, %s79
      %p86 = scmp.eq.s32.totalorder %s36, 7
      %p87 = por %p85, %p86
      %p88 = scmp.ne.s32.totalorder %s79, %s80
      %p89 = scmp.eq.s32.totalorder %s36, 0
      %p90 = por %p88, %p89
      %p91 = scmp.ne.s32.totalorder %s79, %s80
      %p92 = scmp.eq.s32.totalorder %s37, 7
      %p93 = por %p91, %p92
      %p95 = scmp.ne.s32.totalorder %s80, %s94
      %p96 = scmp.eq.s32.totalorder %s37, 0
      %p97 = por %p95, %p96
      %s99 = sadd.s32 %s98, 1
      %p102 = scmp.eq.s32.totalorder %s31, 7
      %p103 = scmp.ne.s32.totalorder %s98, %s100
      %p104 = scmp.eq.s32.totalorder %s31, 0
      %p105 = por %p103, %p104
      %p106 = scmp.ne.s32.totalorder %s98, %s100
      %p107 = scmp.eq.s32.totalorder %s36, 7
      %p108 = por %p106, %p107
      %p109 = scmp.ne.s32.totalorder %s100, %s101
      %p110 = scmp.eq.s32.totalorder %s36, 0
      %p111 = por %p109, %p110
      %p112 = scmp.ne.s32.totalorder %s100, %s101
      %p113 = scmp.eq.s32.totalorder %s37, 7
      %p114 = por %p112, %p113
      %p116 = scmp.ne.s32.totalorder %s101, %s115
      %p117 = scmp.eq.s32.totalorder %s37, 0
      %p118 = por %p116, %p117
      %s120 = sadd.s32 %s119, 1
      %p123 = scmp.eq.s32.totalorder %s31, 7
      %p124 = scmp.ne.s32.totalorder %s119, %s121
      %p125 = scmp.eq.s32.totalorder %s31, 0
      %p126 = por %p124, %p125
      %p127 = scmp.ne.s32.totalorder %s119, %s121
      %p128 = scmp.eq.s32.totalorder %s36, 7
      %p129 = por %p127, %p128
      %p130 = scmp.ne.s32.totalorder %s121, %s122
      %p131 = scmp.eq.s32.totalorder %s36, 0
      %p132 = por %p130, %p131
      %p133 = scmp.ne.s32.totalorder %s121, %s122
      %p134 = scmp.eq.s32.totalorder %s37, 7
      %p135 = por %p133, %p134
      %p137 = scmp.ne.s32.totalorder %s122, %s136
      %p138 = scmp.eq.s32.totalorder %s37, 0
      %p139 = por %p137, %p138
      %s141 = sadd.s32 %s140, 1
      %p144 = scmp.eq.s32.totalorder %s31, 7
      %p145 = scmp.ne.s32.totalorder %s140, %s142
      %p146 = scmp.eq.s32.totalorder %s31, 0
      %p147 = por %p145, %p146
      %p148 = scmp.ne.s32.totalorder %s140, %s142
      %p149 = scmp.eq.s32.totalorder %s36, 7
      %p150 = por %p148, %p149
      %p151 = scmp.ne.s32.totalorder %s142, %s143
      %p152 = scmp.eq.s32.totalorder %s36, 0
      %p153 = por %p151, %p152
      %p154 = scmp.ne.s32.totalorder %s142, %s143
      %p155 = scmp.eq.s32.totalorder %s37, 7
      %p156 = por %p154, %p155
      %p158 = scmp.ne.s32.totalorder %s143, %s157
      %p159 = scmp.eq.s32.totalorder %s37, 0
      %p160 = por %p158, %p159
      %s162 = sadd.s32 %s161, 1
      %p165 = scmp.eq.s32.totalorder %s31, 7
      %p166 = scmp.ne.s32.totalorder %s161, %s163
      %p167 = scmp.eq.s32.totalorder %s31, 0
      %p168 = por %p166, %p167
      %p169 = scmp.ne.s32.totalorder %s161, %s163
      %p170 = scmp.eq.s32.totalorder %s36, 7
      %p171 = por %p169, %p170
      %p172 = scmp.ne.s32.totalorder %s163, %s164
      %p173 = scmp.eq.s32.totalorder %s36, 0
      %p174 = por %p172, %p173
      %p175 = scmp.ne.s32.totalorder %s163, %s164
      %p176 = scmp.eq.s32.totalorder %s37, 7
      %p177 = por %p175, %p176
      %p179 = scmp.ne.s32.totalorder %s164, %s178
      %p180 = scmp.eq.s32.totalorder %s37, 0
      %p181 = por %p179, %p180
      %s183 = sadd.s32 %s182, 1
      %p186 = scmp.eq.s32.totalorder %s31, 7
      %p187 = scmp.ne.s32.totalorder %s182, %s184
      %p188 = scmp.eq.s32.totalorder %s31, 0
      %p189 = por %p187, %p188
      %p190 = scmp.ne.s32.totalorder %s182, %s184
      %p191 = scmp.eq.s32.totalorder %s36, 7
      %p192 = por %p190, %p191
      %p193 = scmp.ne.s32.totalorder %s184, %s185
      %p194 = scmp.eq.s32.totalorder %s36, 0
      %p195 = por %p193, %p194
      %p196 = scmp.ne.s32.totalorder %s184, %s185
      %p197 = scmp.eq.s32.totalorder %s37, 7
      %p198 = por %p196, %p197
      %p200 = scmp.ne.s32.totalorder %s185, %s199
      %p201 = scmp.eq.s32.totalorder %s37, 0
      %p202 = por %p200, %p201
      %s204 = sadd.s32 %s203, 1
      %p207 = scmp.eq.s32.totalorder %s31, 7
      %p208 = scmp.ne.s32.totalorder %s203, %s205
      %p209 = scmp.eq.s32.totalorder %s31, 0
      %p210 = por %p208, %p209
      %p211 = scmp.ne.s32.totalorder %s203, %s205
      %p212 = scmp.eq.s32.totalorder %s36, 7
      %p213 = por %p211, %p212
      %p214 = scmp.ne.s32.totalorder %s205, %s206
      %p215 = scmp.eq.s32.totalorder %s36, 0
      %p216 = por %p214, %p215
      %p217 = scmp.ne.s32.totalorder %s205, %s206
      %p218 = scmp.eq.s32.totalorder %s37, 7
      %p219 = por %p217, %p218
      %p221 = scmp.ne.s32.totalorder %s206, %s220
      %p222 = scmp.eq.s32.totalorder %s37, 0
      %p223 = por %p221, %p222
      %s225 = sadd.s32 %s224, 1
      %p228 = scmp.eq.s32.totalorder %s31, 7
      %p229 = scmp.ne.s32.totalorder %s224, %s226
      %p230 = scmp.eq.s32.totalorder %s31, 0
      %p231 = por %p229, %p230
      %p232 = scmp.ne.s32.totalorder %s224, %s226
      %p233 = scmp.eq.s32.totalorder %s36, 7
      %p234 = por %p232, %p233
      %p235 = scmp.ne.s32.totalorder %s226, %s227
      %p236 = scmp.eq.s32.totalorder %s36, 0
      %p237 = por %p235, %p236
      %p238 = scmp.ne.s32.totalorder %s226, %s227
      %p239 = scmp.eq.s32.totalorder %s37, 7
      %p240 = por %p238, %p239
      %p242 = scmp.ne.s32.totalorder %s227, %s241
      %p243 = scmp.eq.s32.totalorder %s37, 0
      %p244 = por %p242, %p243
      %s246 = sadd.s32 %s245, 1
      %p249 = scmp.eq.s32.totalorder %s31, 7
      %p250 = scmp.ne.s32.totalorder %s245, %s247
      %p251 = scmp.eq.s32.totalorder %s31, 0
      %p252 = por %p250, %p251
      %p253 = scmp.ne.s32.totalorder %s245, %s247
      %p254 = scmp.eq.s32.totalorder %s36, 7
      %p255 = por %p253, %p254
      %p256 = scmp.ne.s32.totalorder %s247, %s248
      %p257 = scmp.eq.s32.totalorder %s36, 0
      %p258 = por %p256, %p257
      %p259 = scmp.ne.s32.totalorder %s247, %s248
      %p260 = scmp.eq.s32.totalorder %s37, 7
      %p261 = por %p259, %p260
      %p263 = scmp.ne.s32.totalorder %s248, %s262
      %p264 = scmp.eq.s32.totalorder %s37, 0
      %p265 = por %p263, %p264
      %s267 = sadd.s32 %s266, 1
      %p270 = scmp.eq.s32.totalorder %s31, 7
      %p271 = scmp.ne.s32.totalorder %s266, %s268
      %p272 = scmp.eq.s32.totalorder %s31, 0
      %p273 = por %p271, %p272
      %p274 = scmp.ne.s32.totalorder %s266, %s268
      %p275 = scmp.eq.s32.totalorder %s36, 7
      %p276 = por %p274, %p275
      %p277 = scmp.ne.s32.totalorder %s268, %s269
      %p278 = scmp.eq.s32.totalorder %s36, 0
      %p279 = por %p277, %p278
      %p280 = scmp.ne.s32.totalorder %s268, %s269
      %p281 = scmp.eq.s32.totalorder %s37, 7
      %p282 = por %p280, %p281
      %p284 = scmp.ne.s32.totalorder %s269, %s283
      %p285 = scmp.eq.s32.totalorder %s37, 0
      %p286 = por %p284, %p285
      %s288 = sadd.s32 %s287, 1
      %p291 = scmp.eq.s32.totalorder %s31, 7
      %p292 = scmp.ne.s32.totalorder %s287, %s289
      %p293 = scmp.eq.s32.totalorder %s31, 0
      %p294 = por %p292, %p293
      %p295 = scmp.ne.s32.totalorder %s287, %s289
      %p296 = scmp.eq.s32.totalorder %s36, 7
      %p297 = por %p295, %p296
      %p298 = scmp.ne.s32.totalorder %s289, %s290
      %p299 = scmp.eq.s32.totalorder %s36, 0
      %p300 = por %p298, %p299
      %p301 = scmp.ne.s32.totalorder %s289, %s290
      %p302 = scmp.eq.s32.totalorder %s37, 7
      %p303 = por %p301, %p302
      %p305 = scmp.ne.s32.totalorder %s290, %s304
      %p306 = scmp.eq.s32.totalorder %s37, 0
      %p307 = por %p305, %p306
      %s309 = sadd.s32 %s308, 1
      %p312 = scmp.eq.s32.totalorder %s31, 7
      %p313 = scmp.ne.s32.totalorder %s308, %s310
      %p314 = scmp.eq.s32.totalorder %s31, 0
      %p315 = por %p313, %p314
      %p316 = scmp.ne.s32.totalorder %s308, %s310
      %p317 = scmp.eq.s32.totalorder %s36, 7
      %p318 = por %p316, %p317
      %p319 = scmp.ne.s32.totalorder %s310, %s311
      %p320 = scmp.eq.s32.totalorder %s36, 0
      %p321 = por %p319, %p320
      %p322 = scmp.ne.s32.totalorder %s310, %s311
      %p323 = scmp.eq.s32.totalorder %s37, 7
      %p324 = por %p322, %p323
      %p326 = scmp.ne.s32.totalorder %s311, %s325
      %p327 = scmp.eq.s32.totalorder %s37, 0
      %p328 = por %p326, %p327
      %s329 = ssub.s32 %s38, %s50
      %p330 = scmp.eq.s32.totalorder %s329, 0
      %s332 = sadd.s32 %s331, 1
      %s333 = scalar_select %p330, %s331, %s332
      %p336 = pneg %p330
      %p337 = scmp.eq.s32.totalorder %s31, 7
      %p338 = por %p336, %p337
      %p339 = scmp.ne.s32.totalorder %s331, %s334
      %p340 = scmp.eq.s32.totalorder %s31, 0
      %p341 = por %p339, %p340
      %p342 = scmp.ne.s32.totalorder %s331, %s334
      %p343 = scmp.eq.s32.totalorder %s36, 7
      %p344 = por %p342, %p343
      %p345 = scmp.ne.s32.totalorder %s334, %s335
      %p346 = scmp.eq.s32.totalorder %s36, 0
      %p347 = por %p345, %p346
      %p348 = scmp.ne.s32.totalorder %s334, %s335
      %p349 = scmp.eq.s32.totalorder %s37, 7
      %p350 = por %p348, %p349
      %p352 = scmp.ne.s32.totalorder %s335, %s351
      %p353 = scmp.eq.s32.totalorder %s37, 0
      %p354 = por %p352, %p353
      %p355 = scmp.le.s32.totalorder 1, %s31
      %p356 = scmp.lt.s32.totalorder %s31, 9
      %p357 = pnand %p355, %p356
      %p358 = pneg %p357
      // Predicated region
      $region9: #{tpu_custom_call.1} parent=5 // pred_check
        _
      $region10: #{tpu_custom_call.1} parent=5 // pred_check_branch
        %360 = sbr.rel (%p357) target = $region12
      $region11: #{tpu_custom_call.1} parent=5 // pred_region
        %s361 = ssub.s32 %s31, 1
        // Predicated region
        $region13: #{tpu_custom_call.1} parent=11 // pred_check
          %p362 = pneg %p90
        $region14: #{tpu_custom_call.1} parent=11 // pred_check_branch
          %364 = sbr.rel (%p362) target = $region16
        $region15: #{tpu_custom_call.1} parent=11 // pred_region
          %s366 = ssub.s32 16, 16
          %367 = vsyncadd [#allocation8], %s366
          %s369 = sshll.u32 [#allocation7], 4
          %s370 = int_to_ptr.vmem [resolvable:$true] %s369
          %372 = dma.hbm_to_vmem [thread:$0]  %s1, 16, %s370, [#allocation8]
        $region16: #{tpu_custom_call.1} parent=11 // pred_fallthru
          _
        // Predicated region
        $region17: #{tpu_custom_call.1} parent=11 // pred_check
          %p373 = pneg %p111
        $region18: #{tpu_custom_call.1} parent=11 // pred_check_branch
          %375 = sbr.rel (%p373) target = $region20
        $region19: #{tpu_custom_call.1} parent=11 // pred_region
          %s377 = ssub.s32 16, 16
          %378 = vsyncadd [#allocation8], %s377
          %s380 = sshll.u32 [#allocation9], 4
          %s381 = int_to_ptr.vmem [resolvable:$true] %s380
          %383 = dma.hbm_to_vmem [thread:$0]  %s2, 16, %s381, [#allocation8]
        $region20: #{tpu_custom_call.1} parent=11 // pred_fallthru
          _
        // Predicated region
        $region21: #{tpu_custom_call.1} parent=11 // pred_check
          %p384 = pneg %p132
        $region22: #{tpu_custom_call.1} parent=11 // pred_check_branch
          %386 = sbr.rel (%p384) target = $region24
        $region23: #{tpu_custom_call.1} parent=11 // pred_region
          %s388 = ssub.s32 256, 256
          %389 = vsyncadd [#allocation11], %s388
          %s390 = sshll.u32 [#allocation10], 4
          %s391 = int_to_ptr.vmem [resolvable:$true] %s390
          %396 = dma.hbm_to_vmem [thread:$0]  %s3, 256, %s391, [#allocation11], 64, 64, 4
        $region24: #{tpu_custom_call.1} parent=11 // pred_fallthru
          _
        // Predicated region
        $region25: #{tpu_custom_call.1} parent=11 // pred_check
          %p397 = pneg %p153
        $region26: #{tpu_custom_call.1} parent=11 // pred_check_branch
          %399 = sbr.rel (%p397) target = $region28
        $region27: #{tpu_custom_call.1} parent=11 // pred_region
          %s401 = ssub.s32 16, 16
          %402 = vsyncadd [#allocation11], %s401
          %s404 = sshll.u32 [#allocation12], 4
          %s405 = int_to_ptr.vmem [resolvable:$true] %s404
          %407 = dma.hbm_to_vmem [thread:$0]  %s4, 16, %s405, [#allocation11]
        $region28: #{tpu_custom_call.1} parent=11 // pred_fallthru
          _
        // Predicated region
        $region29: #{tpu_custom_call.1} parent=11 // pred_check
          %p408 = pneg %p174
        $region30: #{tpu_custom_call.1} parent=11 // pred_check_branch
          %410 = sbr.rel (%p408) target = $region32
        $region31: #{tpu_custom_call.1} parent=11 // pred_region
          %s412 = ssub.s32 256, 256
          %413 = vsyncadd [#allocation14], %s412
          %s414 = sshll.u32 [#allocation13], 4
          %s415 = int_to_ptr.vmem [resolvable:$true] %s414
          %420 = dma.hbm_to_vmem [thread:$0]  %s5, 256, %s415, [#allocation14], 64, 64, 4
        $region32: #{tpu_custom_call.1} parent=11 // pred_fallthru
          _
        // Predicated region
        $region33: #{tpu_custom_call.1} parent=11 // pred_check
          %p421 = pneg %p195
        $region34: #{tpu_custom_call.1} parent=11 // pred_check_branch
          %423 = sbr.rel (%p421) target = $region36
        $region35: #{tpu_custom_call.1} parent=11 // pred_region
          %s425 = ssub.s32 16, 16
          %426 = vsyncadd [#allocation14], %s425
          %s428 = sshll.u32 [#allocation15], 4
          %s429 = int_to_ptr.vmem [resolvable:$true] %s428
          %431 = dma.hbm_to_vmem [thread:$0]  %s6, 16, %s429, [#allocation14]
        $region36: #{tpu_custom_call.1} parent=11 // pred_fallthru
          _
        // Predicated region
        $region37: #{tpu_custom_call.1} parent=11 // pred_check
          %p432 = pneg %p216
        $region38: #{tpu_custom_call.1} parent=11 // pred_check_branch
          %434 = sbr.rel (%p432) target = $region40
        $region39: #{tpu_custom_call.1} parent=11 // pred_region
          %s436 = ssub.s32 16, 16
          %437 = vsyncadd [#allocation17], %s436
          %s439 = sshll.u32 [#allocation16], 4
          %s440 = int_to_ptr.vmem [resolvable:$true] %s439
          %442 = dma.hbm_to_vmem [thread:$0]  %s7, 16, %s440, [#allocation17]
        $region40: #{tpu_custom_call.1} parent=11 // pred_fallthru
          _
        // Predicated region
        $region41: #{tpu_custom_call.1} parent=11 // pred_check
          %p443 = pneg %p237
        $region42: #{tpu_custom_call.1} parent=11 // pred_check_branch
          %445 = sbr.rel (%p443) target = $region44
        $region43: #{tpu_custom_call.1} parent=11 // pred_region
          %s447 = ssub.s32 16, 16
          %448 = vsyncadd [#allocation17], %s447
          %s450 = sshll.u32 [#allocation18], 4
          %s451 = int_to_ptr.vmem [resolvable:$true] %s450
          %453 = dma.hbm_to_vmem [thread:$0]  %s8, 16, %s451, [#allocation17]
        $region44: #{tpu_custom_call.1} parent=11 // pred_fallthru
          _
        // Predicated region
        $region45: #{tpu_custom_call.1} parent=11 // pred_check
          %p454 = pneg %p258
        $region46: #{tpu_custom_call.1} parent=11 // pred_check_branch
          %456 = sbr.rel (%p454) target = $region48
        $region47: #{tpu_custom_call.1} parent=11 // pred_region
          %s458 = ssub.s32 256, 256
          %459 = vsyncadd [#allocation20], %s458
          %s460 = sshll.u32 [#allocation19], 4
          %s461 = int_to_ptr.vmem [resolvable:$true] %s460
          %466 = dma.hbm_to_vmem [thread:$0]  %s9, 256, %s461, [#allocation20], 64, 64, 4
        $region48: #{tpu_custom_call.1} parent=11 // pred_fallthru
          _
        // Predicated region
        $region49: #{tpu_custom_call.1} parent=11 // pred_check
          %p467 = pneg %p279
        $region50: #{tpu_custom_call.1} parent=11 // pred_check_branch
          %469 = sbr.rel (%p467) target = $region52
        $region51: #{tpu_custom_call.1} parent=11 // pred_region
          %s471 = ssub.s32 16, 16
          %472 = vsyncadd [#allocation20], %s471
          %s474 = sshll.u32 [#allocation21], 4
          %s475 = int_to_ptr.vmem [resolvable:$true] %s474
          %477 = dma.hbm_to_vmem [thread:$0]  %s10, 16, %s475, [#allocation20]
        $region52: #{tpu_custom_call.1} parent=11 // pred_fallthru
          _
        // Predicated region
        $region53: #{tpu_custom_call.1} parent=11 // pred_check
          %p478 = pneg %p300
        $region54: #{tpu_custom_call.1} parent=11 // pred_check_branch
          %480 = sbr.rel (%p478) target = $region56
        $region55: #{tpu_custom_call.1} parent=11 // pred_region
          %s482 = ssub.s32 1024, 1024
          %483 = vsyncadd [#allocation23], %s482
          %s484 = sshll.u32 [#allocation22], 4
          %s485 = int_to_ptr.vmem [resolvable:$true] %s484
          %490 = dma.hbm_to_vmem [thread:$0]  %s11, 1024, %s485, [#allocation23], 64, 64, 4
        $region56: #{tpu_custom_call.1} parent=11 // pred_fallthru
          _
        // Predicated region
        $region57: #{tpu_custom_call.1} parent=11 // pred_check
          %p491 = pneg %p321
        $region58: #{tpu_custom_call.1} parent=11 // pred_check_branch
          %493 = sbr.rel (%p491) target = $region60
        $region59: #{tpu_custom_call.1} parent=11 // pred_region
          %s495 = ssub.s32 16, 16
          %496 = vsyncadd [#allocation23], %s495
          %s498 = sshll.u32 [#allocation24], 4
          %s499 = int_to_ptr.vmem [resolvable:$true] %s498
          %501 = dma.hbm_to_vmem [thread:$0]  %s12, 16, %s499, [#allocation23]
        $region60: #{tpu_custom_call.1} parent=11 // pred_fallthru
          _
      $region12: #{tpu_custom_call.1} parent=5 // pred_fallthru
        _
      %p502 = scmp.lt.s32.totalorder %s31, 8
      // Predicated region
      $region61: #{tpu_custom_call.1} parent=5 // pred_check
        %p503 = pneg %p502
      $region62: #{tpu_custom_call.1} parent=5 // pred_check_branch
        %505 = sbr.rel (%p503) target = $region64
      $region63: #{tpu_custom_call.1} parent=5 // pred_region
        // Predicated region
        $region65: #{tpu_custom_call.1} parent=63 // pred_check
          %p506 = pneg %p63
        $region66: #{tpu_custom_call.1} parent=63 // pred_check_branch
          %508 = sbr.rel (%p506) target = $region68
        $region67: #{tpu_custom_call.1} parent=63 // pred_region
          %s509 = sand.u32 %s53, 1
          %s510 = scalar_lea.sflag [#allocation5], %s509
          %s511 = sand.u32 %s53, 1
          %s512 = smul.addr %s511, 8
          %s513 = scalar_lea.vmem [#allocation4], %s512
          %s515 = ssub.s32 128, 128
          %516 = vsyncadd %s510, %s515
          %s517 = smul.addr %s38, 128
          %s518 = scalar_lea.hbm %s0, %s517
          %s520 = sshll.u32 %s513, 4
          %s521 = int_to_ptr.vmem [resolvable:$true] %s520
          %523 = dma.hbm_to_vmem [thread:$0]  %s518, 128, %s521, %s510
        $region68: #{tpu_custom_call.1} parent=63 // pred_fallthru
          _
      $region64: #{tpu_custom_call.1} parent=5 // pred_fallthru
        _
      %p524 = scmp.le.s32.totalorder 1, %s31
      %p525 = scmp.lt.s32.totalorder %s31, 9
      %p526 = pnand %p524, %p525
      %p527 = pneg %p526
      // Predicated region
      $region69: #{tpu_custom_call.1} parent=5 // pred_check
        _
      $region70: #{tpu_custom_call.1} parent=5 // pred_check_branch
        %529 = sbr.rel (%p526) target = $region72
      $region71: #{tpu_custom_call.1} parent=5 // pred_region
        %s530 = ssub.s32 %s31, 1
        %s531 = sand.u32 %s56, 1
        %s532 = scalar_lea.sflag [#allocation5], %s531
        %s533 = sand.u32 %s56, 1
        %s534 = smul.addr %s533, 8
        %s535 = scalar_lea.vmem [#allocation4], %s534
        // Predicated region
        $region73: #{tpu_custom_call.1} parent=71 // pred_check
          %p536 = pneg %p69
        $region74: #{tpu_custom_call.1} parent=71 // pred_check_branch
          %538 = sbr.rel (%p536) target = $region76
        $region75: #{tpu_custom_call.1} parent=71 // pred_region
          %539 = dma.done %s532, 128
        $region76: #{tpu_custom_call.1} parent=71 // pred_fallthru
          _
        // Predicated region
        $region77: #{tpu_custom_call.1} parent=71 // pred_check
          %p540 = pneg %p90
        $region78: #{tpu_custom_call.1} parent=71 // pred_check_branch
          %542 = sbr.rel (%p540) target = $region80
        $region79: #{tpu_custom_call.1} parent=71 // pred_region
          %543 = dma.done [#allocation8], 16
        $region80: #{tpu_custom_call.1} parent=71 // pred_fallthru
          _
        // Predicated region
        $region81: #{tpu_custom_call.1} parent=71 // pred_check
          %p544 = pneg %p111
        $region82: #{tpu_custom_call.1} parent=71 // pred_check_branch
          %546 = sbr.rel (%p544) target = $region84
        $region83: #{tpu_custom_call.1} parent=71 // pred_region
          %547 = dma.done [#allocation8], 16
        $region84: #{tpu_custom_call.1} parent=71 // pred_fallthru
          _
        // Predicated region
        $region85: #{tpu_custom_call.1} parent=71 // pred_check
          %p548 = pneg %p132
        $region86: #{tpu_custom_call.1} parent=71 // pred_check_branch
          %550 = sbr.rel (%p548) target = $region88
        $region87: #{tpu_custom_call.1} parent=71 // pred_region
          %551 = dma.done [#allocation11], 256
        $region88: #{tpu_custom_call.1} parent=71 // pred_fallthru
          _
        // Predicated region
        $region89: #{tpu_custom_call.1} parent=71 // pred_check
          %p552 = pneg %p153
        $region90: #{tpu_custom_call.1} parent=71 // pred_check_branch
          %554 = sbr.rel (%p552) target = $region92
        $region91: #{tpu_custom_call.1} parent=71 // pred_region
          %555 = dma.done [#allocation11], 16
        $region92: #{tpu_custom_call.1} parent=71 // pred_fallthru
          _
        // Predicated region
        $region93: #{tpu_custom_call.1} parent=71 // pred_check
          %p556 = pneg %p174
        $region94: #{tpu_custom_call.1} parent=71 // pred_check_branch
          %558 = sbr.rel (%p556) target = $region96
        $region95: #{tpu_custom_call.1} parent=71 // pred_region
          %559 = dma.done [#allocation14], 256
        $region96: #{tpu_custom_call.1} parent=71 // pred_fallthru
          _
        // Predicated region
        $region97: #{tpu_custom_call.1} parent=71 // pred_check
          %p560 = pneg %p195
        $region98: #{tpu_custom_call.1} parent=71 // pred_check_branch
          %562 = sbr.rel (%p560) target = $region100
        $region99: #{tpu_custom_call.1} parent=71 // pred_region
          %563 = dma.done [#allocation14], 16
        $region100: #{tpu_custom_call.1} parent=71 // pred_fallthru
          _
        // Predicated region
        $region101: #{tpu_custom_call.1} parent=71 // pred_check
          %p564 = pneg %p216
        $region102: #{tpu_custom_call.1} parent=71 // pred_check_branch
          %566 = sbr.rel (%p564) target = $region104
        $region103: #{tpu_custom_call.1} parent=71 // pred_region
          %567 = dma.done [#allocation17], 16
        $region104: #{tpu_custom_call.1} parent=71 // pred_fallthru
          _
        // Predicated region
        $region105: #{tpu_custom_call.1} parent=71 // pred_check
          %p568 = pneg %p237
        $region106: #{tpu_custom_call.1} parent=71 // pred_check_branch
          %570 = sbr.rel (%p568) target = $region108
        $region107: #{tpu_custom_call.1} parent=71 // pred_region
          %571 = dma.done [#allocation17], 16
        $region108: #{tpu_custom_call.1} parent=71 // pred_fallthru
          _
        // Predicated region
        $region109: #{tpu_custom_call.1} parent=71 // pred_check
          %p572 = pneg %p258
        $region110: #{tpu_custom_call.1} parent=71 // pred_check_branch
          %574 = sbr.rel (%p572) target = $region112
        $region111: #{tpu_custom_call.1} parent=71 // pred_region
          %575 = dma.done [#allocation20], 256
        $region112: #{tpu_custom_call.1} parent=71 // pred_fallthru
          _
        // Predicated region
        $region113: #{tpu_custom_call.1} parent=71 // pred_check
          %p576 = pneg %p279
        $region114: #{tpu_custom_call.1} parent=71 // pred_check_branch
          %578 = sbr.rel (%p576) target = $region116
        $region115: #{tpu_custom_call.1} parent=71 // pred_region
          %579 = dma.done [#allocation20], 16
        $region116: #{tpu_custom_call.1} parent=71 // pred_fallthru
          _
        // Predicated region
        $region117: #{tpu_custom_call.1} parent=71 // pred_check
          %p580 = pneg %p300
        $region118: #{tpu_custom_call.1} parent=71 // pred_check_branch
          %582 = sbr.rel (%p580) target = $region120
        $region119: #{tpu_custom_call.1} parent=71 // pred_region
          %583 = dma.done [#allocation23], 1024
        $region120: #{tpu_custom_call.1} parent=71 // pred_fallthru
          _
        // Predicated region
        $region121: #{tpu_custom_call.1} parent=71 // pred_check
          %p584 = pneg %p321
        $region122: #{tpu_custom_call.1} parent=71 // pred_check_branch
          %586 = sbr.rel (%p584) target = $region124
        $region123: #{tpu_custom_call.1} parent=71 // pred_region
          %587 = dma.done [#allocation23], 16
        $region124: #{tpu_custom_call.1} parent=71 // pred_fallthru
          _
        %s588 = sand.u32 %s56, 1
        %s589 = scalar_lea.sflag [#allocation5], %s588
        %s590 = sand.u32 %s56, 1
        %s591 = smul.addr %s590, 8
        %s592 = scalar_lea.vmem [#allocation4], %s591
        %p593 = pneg %p69
        %p594 = pneg %p66
        %p595 = pneg %p90
        %p596 = pneg %p87
        %p597 = pneg %p111
        %p598 = pneg %p108
        %p599 = pneg %p132
        %p600 = pneg %p129
        %p601 = pneg %p153
        %p602 = pneg %p150
        %p603 = pneg %p174
        %p604 = pneg %p171
        %p605 = pneg %p195
        %p606 = pneg %p192
        %p607 = pneg %p216
        %p608 = pneg %p213
        %p609 = pneg %p237
        %p610 = pneg %p234
        %p611 = pneg %p258
        %p612 = pneg %p255
        %p613 = pneg %p279
        %p614 = pneg %p276
        %p615 = pneg %p300
        %p616 = pneg %p297
        %p617 = pneg %p321
        %p618 = pneg %p318
        %p619 = pneg %p347
        %p620 = pneg %p344
        %s621 = sand.u32 %s334, 1
        %s622 = scalar_lea.sflag [#allocation6], %s621
        %s623 = sand.u32 %s334, 1
        %s624 = smul.addr %s623, 8
        %s625 = scalar_lea.vmem [#allocation25], %s624
        %p627 = scmp.eq.s32.totalorder %s41, 0
        // Predicated region
        $region125: #{tpu_custom_call.1} parent=71 // pred_check
          %p628 = pneg %p627
        $region126: #{tpu_custom_call.1} parent=71 // pred_check_branch
          %630 = sbr.rel (%p628) target = $region128
        $region127: #{tpu_custom_call.1} parent=71 // pred_region
          %v631 = vld [vmem:[%s535] sm:$0xff]
          %v632 = vld [vmem:[#allocation7] sm:$0x1]
          %v633 = vld [vmem:[#allocation9] sm:$0x1]
          %vm634 = vcmask 261120
          %v635 = vsel %vm634, %v631, 0.0
          %636 = vadd.xlane.f32.xlu0 %v635
          %v637 = vpop.xlane.xlu0 %636
          %v638 = vrcp.pop 32.0
          %v639 = vmul.f32 %v637, %v638
          %v640 = vsub.f32 %v631, %v639
          %v641 = vmul.f32 %v640, %v640
          %v642 = vsel %vm634, %v641, 0.0
          %643 = vadd.xlane.f32.xlu0 %v642
          %v644 = vpop.xlane.xlu0 %643
          %v645 = vmul.f32 %v644, %v638
          %v646 = vadd.f32 %v645, 1e-05
          %v647 = vrsqrt.pop %v646
          %v648 = vmul.f32 %v640, %v647
          %v650 = vlaneseq
          %v651 = vshrl.u32 %v650, 7
          %v652 = vsub.s32 0, %v651
          %v653 = vrot.slane %v632, %v652
          %v655 = vmul.f32 %v648, %v653
          %v657 = vlaneseq
          %v658 = vshrl.u32 %v657, 7
          %v659 = vsub.s32 0, %v658
          %v660 = vrot.slane %v633, %v659
          %v662 = vadd.f32 %v655, %v660
          %v663 = vpack.c.bf16 %v662, %v662
          %v664 = vld [vmem:[#allocation10] sm:$0xf]
          %v665 = vld [vmem:[#allocation10 + $0x4] sm:$0xf]
          %v666 = vld [vmem:[#allocation10 + $0x8] sm:$0xf]
          %v667 = vld [vmem:[#allocation10 + $0xc] sm:$0xf]
          %v668 = vld [vmem:[#allocation12] sm:$0x1]
          %v670 = vlaneseq
          %v671 = vshrl.u32 %v670, 7
          %v672 = vsub.s32 0, %v671
          %v673 = vrot.slane %v668, %v672
          %v679 = vunpack.c.l.b16 %v664
          %v680 = vunpack.c.l.b16 %v665
          %v681 = vunpack.c.l.b16 %v666
          %v682 = vunpack.c.l.b16 %v667
          %v683 = vpack.c.b16 %v680, %v679
          %v684 = vpack.c.b16 %v682, %v681
          %v688 = vsel %vm634, %v663, 0
          %690 = vmatprep.subr.bf16.mxu0 0
          %691 = vmatpush1.bf16.msra.mxu0 %v683
          %692 = vmatprep.subr.bf16.mxu0 0
          %693 = vmatpush1.bf16.msra.mxu0 %v684
          %694 = vmatprep.subr.bf16.mxu0 0
          %695 = vmatpush1.bf16.msra.mxu0 0
          %696 = vmatprep.subr.bf16.mxu0 0
          %697 = vmatpush1.bf16.msra.mxu0 0
          %698 = vmatprep.subr.bf16.mxu0 0
          %699 = vmatpush1.bf16.msra.mxu0 0
          %700 = vmatprep.subr.bf16.mxu0 0
          %701 = vmatpush1.bf16.msra.mxu0 0
          %702 = vmatprep.subr.bf16.mxu0 0
          %703 = vmatpush1.bf16.msra.mxu0 0
          %704 = vmatprep.subr.bf16.mxu0 0
          %705 = vmatpush1.bf16.msra.mxu0 0
          %706 = vmatprep.subr.bf16.mxu0 0
          %707 = vmatpush1.bf16.msra.mxu0 0
          %708 = vmatprep.subr.bf16.mxu0 0
          %709 = vmatpush1.bf16.msra.mxu0 0
          %710 = vmatprep.subr.bf16.mxu0 0
          %711 = vmatpush1.bf16.msra.mxu0 0
          %712 = vmatprep.subr.bf16.mxu0 0
          %713 = vmatpush1.bf16.msra.mxu0 0
          %714 = vmatprep.subr.bf16.mxu0 0
          %715 = vmatpush1.bf16.msra.mxu0 0
          %716 = vmatprep.subr.bf16.mxu0 0
          %717 = vmatpush1.bf16.msra.mxu0 0
          %718 = vmatprep.subr.bf16.mxu0 0
          %719 = vmatpush1.bf16.msra.mxu0 0
          %720 = vmatprep.subr.bf16.mxu0 0
          %721 = vmatpush1.bf16.msra.mxu0 0
          %722 = vmatprep.mubr.bf16.mxu0 0
          %723 = vmatmul.mubr.bf16.gmra.mrb[0].mxu0 %v688
          %v724 = vpop.f32.mrb[0].mxu0
          %v725 = vadd.f32 %v673, %v724
          %v726 = vpop.f32.mrb[0].mxu0
          %v727 = vpop.f32.mrb[0].mxu0
          %v728 = vpop.f32.mrb[0].mxu0
          %729 = vdwg.mxu0
          %v730 = vpack.c.bf16 %v725, %v725
          %vm731 = vcmask 191488
          %732 = vst.msk [vmem:[#allocation2] sm:$0xf] %vm731, %v730
          %v734 = vunpack.c.l.b16 %v730
          %v735 = vpack.c.b16 %v734, %v734
          %736 = vrot.lane.b32.xlu0 %v735, 104
          %v737 = vpop.permute.xlu0 %736
          %s739 = scalar_lea.vmem [#allocation2], 4
          %740 = vst.msk [vmem:[%s739] sm:$0xf] %vm731, %v737
          %741 = vrot.lane.b32.xlu0 %v735, 80
          %v742 = vpop.permute.xlu0 %741
          %s744 = scalar_lea.vmem [#allocation2], 8
          %745 = vst.msk [vmem:[%s744] sm:$0xf] %vm731, %v742
          %746 = vrot.lane.b32.xlu0 %v735, 56
          %v747 = vpop.permute.xlu0 %746
          %s749 = scalar_lea.vmem [#allocation2], 12
          %750 = vst.msk [vmem:[%s749] sm:$0xf] %vm731, %v747
          %751 = vst.msk [vmem:[#allocation3] sm:$0xff] %vm634, 0.0
        $region128: #{tpu_custom_call.1} parent=71 // pred_fallthru
          _
        %s752 = smul.addr %s41, 4
        %s753 = scalar_lea.vmem [#allocation2], %s752
        %v754 = vld [vmem:[%s753] sm:$0xf]
        %v756 = vunpack.c.l.b16 %v754
        %v757 = vpack.c.b16 %v756, %v756
        %758 = vrot.lane.b32.xlu0 %v757, 120
        %v759 = vpop.permute.xlu0 %758
        %vm760 = vcmask 64512
        %v762 = vsel %vm760, %v754, 0
        %v765 = vsel %vm760, %v759, 0
        %767 = vmatprep.subr.bf16.mxu0 0
        %768 = vmatpush1.bf16.xpose.msra.mxu0 %v765
        %769 = vmatprep.subr.bf16.mxu0 0
        %770 = vmatpush1.bf16.xpose.msra.mxu0 0
        %771 = vmatprep.subr.bf16.mxu0 0
        %772 = vmatpush1.bf16.xpose.msra.mxu0 0
        %773 = vmatprep.subr.bf16.mxu0 0
        %774 = vmatpush1.bf16.xpose.msra.mxu0 0
        %775 = vmatprep.subr.bf16.mxu0 0
        %776 = vmatpush1.bf16.xpose.msra.mxu0 0
        %777 = vmatprep.subr.bf16.mxu0 0
        %778 = vmatpush1.bf16.xpose.msra.mxu0 0
        %779 = vmatprep.subr.bf16.mxu0 0
        %780 = vmatpush1.bf16.xpose.msra.mxu0 0
        %781 = vmatprep.subr.bf16.mxu0 0
        %782 = vmatpush1.bf16.xpose.msra.mxu0 0
        %783 = vmatprep.subr.bf16.mxu0 0
        %784 = vmatpush1.bf16.xpose.msra.mxu0 0
        %785 = vmatprep.subr.bf16.mxu0 0
        %786 = vmatpush1.bf16.xpose.msra.mxu0 0
        %787 = vmatprep.subr.bf16.mxu0 0
        %788 = vmatpush1.bf16.xpose.msra.mxu0 0
        %789 = vmatprep.subr.bf16.mxu0 0
        %790 = vmatpush1.bf16.xpose.msra.mxu0 0
        %791 = vmatprep.subr.bf16.mxu0 0
        %792 = vmatpush1.bf16.xpose.msra.mxu0 0
        %793 = vmatprep.subr.bf16.mxu0 0
        %794 = vmatpush1.bf16.xpose.msra.mxu0 0
        %795 = vmatprep.subr.bf16.mxu0 0
        %796 = vmatpush1.bf16.xpose.msra.mxu0 0
        %797 = vmatprep.subr.bf16.mxu0 0
        %798 = vmatpush1.bf16.xpose.msra.mxu0 0
        %799 = vmatprep.mubr.bf16.mxu0 0
        %800 = vmatmul.mubr.bf16.gmra.mrb[0].mxu0 %v762
        %v801 = vpop.f32.mrb[0].mxu0
        %v802 = vadd.f32 0.0, %v801
        %v803 = vpop.f32.mrb[0].mxu0
        %v804 = vpop.f32.mrb[0].mxu0
        %v805 = vpop.f32.mrb[0].mxu0
        %806 = vdwg.mxu0
        %v807 = vsel %vm760, %v802, -inf
        %808 = vmax.xlane.f32.xlu0 %v807
        %v809 = vpop.xlane.xlu0 %808
        %v810 = vsub.f32 %v802, %v809
        %v811 = vmul.f32 %v810, 1.442695
        %v812 = vpow.pop %v811
        %v813 = vsel %vm760, %v812, 0.0
        %814 = vadd.xlane.f32.xlu0 %v813
        %v815 = vpop.xlane.xlu0 %814
        %v816 = vrcp.pop %v815
        %v817 = vmul.f32 %v812, %v816
        %v818 = vpack.c.bf16 %v817, %v817
        %819 = vrot.lane.b32.xlu0 %v757, 112
        %v820 = vpop.permute.xlu0 %819
        %v822 = vsel %vm760, %v818, 0
        %vm824 = vcmask 1043456
        %v826 = vsel %vm824, %v820, 0
        %828 = vmatprep.subr.bf16.mxu0 0
        %829 = vmatpush1.bf16.msra.mxu0 %v826
        %830 = vmatprep.subr.bf16.mxu0 0
        %831 = vmatpush1.bf16.msra.mxu0 0
        %832 = vmatprep.subr.bf16.mxu0 0
        %833 = vmatpush1.bf16.msra.mxu0 0
        %834 = vmatprep.subr.bf16.mxu0 0
        %835 = vmatpush1.bf16.msra.mxu0 0
        %836 = vmatprep.subr.bf16.mxu0 0
        %837 = vmatpush1.bf16.msra.mxu0 0
        %838 = vmatprep.subr.bf16.mxu0 0
        %839 = vmatpush1.bf16.msra.mxu0 0
        %840 = vmatprep.subr.bf16.mxu0 0
        %841 = vmatpush1.bf16.msra.mxu0 0
        %842 = vmatprep.subr.bf16.mxu0 0
        %843 = vmatpush1.bf16.msra.mxu0 0
        %844 = vmatprep.subr.bf16.mxu0 0
        %845 = vmatpush1.bf16.msra.mxu0 0
        %846 = vmatprep.subr.bf16.mxu0 0
        %847 = vmatpush1.bf16.msra.mxu0 0
        %848 = vmatprep.subr.bf16.mxu0 0
        %849 = vmatpush1.bf16.msra.mxu0 0
        %850 = vmatprep.subr.bf16.mxu0 0
        %851 = vmatpush1.bf16.msra.mxu0 0
        %852 = vmatprep.subr.bf16.mxu0 0
        %853 = vmatpush1.bf16.msra.mxu0 0
        %854 = vmatprep.subr.bf16.mxu0 0
        %855 = vmatpush1.bf16.msra.mxu0 0
        %856 = vmatprep.subr.bf16.mxu0 0
        %857 = vmatpush1.bf16.msra.mxu0 0
        %858 = vmatprep.subr.bf16.mxu0 0
        %859 = vmatpush1.bf16.msra.mxu0 0
        %860 = vmatprep.mubr.bf16.mxu0 0
        %861 = vmatmul.mubr.bf16.gmra.mrb[0].mxu0 %v822
        %v862 = vpop.f32.mrb[0].mxu0
        %v863 = vadd.f32 0.0, %v862
        %v864 = vpop.f32.mrb[0].mxu0
        %v865 = vpop.f32.mrb[0].mxu0
        %v866 = vpop.f32.mrb[0].mxu0
        %867 = vdwg.mxu0
        %v868 = vld [vmem:[#allocation3] sm:$0xff]
        %v869 = vpack.c.bf16 %v863, %v863
        %s870 = smul.addr %s41, 4
        %s871 = scalar_lea.vmem [#allocation13], %s870
        %v872 = vld [vmem:[%s871] sm:$0xf]
        %v874 = vsel %vm760, %v869, 0
        %v877 = vsel %vm824, %v872, 0
        %879 = vmatprep.subr.bf16.mxu0 0
        %880 = vmatpush1.bf16.msra.mxu0 %v877
        %881 = vmatprep.subr.bf16.mxu0 0
        %882 = vmatpush1.bf16.msra.mxu0 0
        %883 = vmatprep.subr.bf16.mxu0 0
        %884 = vmatpush1.bf16.msra.mxu0 0
        %885 = vmatprep.subr.bf16.mxu0 0
        %886 = vmatpush1.bf16.msra.mxu0 0
        %887 = vmatprep.subr.bf16.mxu0 0
        %888 = vmatpush1.bf16.msra.mxu0 0
        %889 = vmatprep.subr.bf16.mxu0 0
        %890 = vmatpush1.bf16.msra.mxu0 0
        %891 = vmatprep.subr.bf16.mxu0 0
        %892 = vmatpush1.bf16.msra.mxu0 0
        %893 = vmatprep.subr.bf16.mxu0 0
        %894 = vmatpush1.bf16.msra.mxu0 0
        %895 = vmatprep.subr.bf16.mxu0 0
        %896 = vmatpush1.bf16.msra.mxu0 0
        %897 = vmatprep.subr.bf16.mxu0 0
        %898 = vmatpush1.bf16.msra.mxu0 0
        %899 = vmatprep.subr.bf16.mxu0 0
        %900 = vmatpush1.bf16.msra.mxu0 0
        %901 = vmatprep.subr.bf16.mxu0 0
        %902 = vmatpush1.bf16.msra.mxu0 0
        %903 = vmatprep.subr.bf16.mxu0 0
        %904 = vmatpush1.bf16.msra.mxu0 0
        %905 = vmatprep.subr.bf16.mxu0 0
        %906 = vmatpush1.bf16.msra.mxu0 0
        %907 = vmatprep.subr.bf16.mxu0 0
        %908 = vmatpush1.bf16.msra.mxu0 0
        %909 = vmatprep.subr.bf16.mxu0 0
        %910 = vmatpush1.bf16.msra.mxu0 0
        %911 = vmatprep.mubr.bf16.mxu0 0
        %912 = vmatmul.mubr.bf16.gmra.mrb[0].mxu0 %v874
        %v913 = vpop.f32.mrb[0].mxu0
        %v914 = vadd.f32 0.0, %v913
        %v915 = vpop.f32.mrb[0].mxu0
        %v916 = vpop.f32.mrb[0].mxu0
        %v917 = vpop.f32.mrb[0].mxu0
        %918 = vdwg.mxu0
        %v919 = vadd.f32 %v868, %v914
        %vm920 = vcmask 261120
        %921 = vst.msk [vmem:[#allocation3] sm:$0xff] %vm920, %v919
        %p922 = scmp.eq.s32.totalorder %s41, 3
        // Predicated region
        $region129: #{tpu_custom_call.1} parent=71 // pred_check
          %p923 = pneg %p922
        $region130: #{tpu_custom_call.1} parent=71 // pred_check_branch
          %925 = sbr.rel (%p923) target = $region132
        $region131: #{tpu_custom_call.1} parent=71 // pred_region
          %v926 = vld [vmem:[%s535] sm:$0xff]
          %v927 = vld [vmem:[#allocation3] sm:$0xff]
          %v928 = vadd.f32 %v926, %v927
          %v929 = vld [vmem:[#allocation15] sm:$0x1]
          %v931 = vlaneseq
          %v932 = vshrl.u32 %v931, 7
          %v933 = vsub.s32 0, %v932
          %v934 = vrot.slane %v929, %v933
          %v936 = vadd.f32 %v928, %v934
          %v937 = vld [vmem:[#allocation16] sm:$0x1]
          %v938 = vld [vmem:[#allocation18] sm:$0x1]
          %v939 = vsel %vm920, %v936, 0.0
          %940 = vadd.xlane.f32.xlu0 %v939
          %v941 = vpop.xlane.xlu0 %940
          %v942 = vrcp.pop 32.0
          %v943 = vmul.f32 %v941, %v942
          %v944 = vsub.f32 %v936, %v943
          %v945 = vmul.f32 %v944, %v944
          %v946 = vsel %vm920, %v945, 0.0
          %947 = vadd.xlane.f32.xlu0 %v946
          %v948 = vpop.xlane.xlu0 %947
          %v949 = vmul.f32 %v948, %v942
          %v950 = vadd.f32 %v949, 1e-05
          %v951 = vrsqrt.pop %v950
          %v952 = vmul.f32 %v944, %v951
          %v954 = vlaneseq
          %v955 = vshrl.u32 %v954, 7
          %v956 = vsub.s32 0, %v955
          %v957 = vrot.slane %v937, %v956
          %v959 = vmul.f32 %v952, %v957
          %v961 = vlaneseq
          %v962 = vshrl.u32 %v961, 7
          %v963 = vsub.s32 0, %v962
          %v964 = vrot.slane %v938, %v963
          %v966 = vadd.f32 %v959, %v964
          %v967 = vpack.c.bf16 %v966, %v966
          %v968 = vld [vmem:[#allocation19] sm:$0xf]
          %v969 = vld [vmem:[#allocation19 + $0x4] sm:$0xf]
          %v970 = vld [vmem:[#allocation19 + $0x8] sm:$0xf]
          %v971 = vld [vmem:[#allocation19 + $0xc] sm:$0xf]
          %v972 = vld [vmem:[#allocation21] sm:$0x1]
          %v974 = vlaneseq
          %v975 = vshrl.u32 %v974, 7
          %v976 = vsub.s32 0, %v975
          %v977 = vrot.slane %v972, %v976
          %v983 = vunpack.c.l.b16 %v968
          %v984 = vunpack.c.l.b16 %v969
          %v985 = vunpack.c.l.b16 %v970
          %v986 = vunpack.c.l.b16 %v971
          %v987 = vpack.c.b16 %v984, %v983
          %v988 = vpack.c.b16 %v986, %v985
          %v992 = vsel %vm920, %v967, 0
          %994 = vmatprep.subr.bf16.mxu0 0
          %995 = vmatpush1.bf16.msra.mxu0 %v987
          %996 = vmatprep.subr.bf16.mxu0 0
          %997 = vmatpush1.bf16.msra.mxu0 %v988
          %998 = vmatprep.subr.bf16.mxu0 0
          %999 = vmatpush1.bf16.msra.mxu0 0
          %1000 = vmatprep.subr.bf16.mxu0 0
          %1001 = vmatpush1.bf16.msra.mxu0 0
          %1002 = vmatprep.subr.bf16.mxu0 0
          %1003 = vmatpush1.bf16.msra.mxu0 0
          %1004 = vmatprep.subr.bf16.mxu0 0
          %1005 = vmatpush1.bf16.msra.mxu0 0
          %1006 = vmatprep.subr.bf16.mxu0 0
          %1007 = vmatpush1.bf16.msra.mxu0 0
          %1008 = vmatprep.subr.bf16.mxu0 0
          %1009 = vmatpush1.bf16.msra.mxu0 0
          %1010 = vmatprep.subr.bf16.mxu0 0
          %1011 = vmatpush1.bf16.msra.mxu0 0
          %1012 = vmatprep.subr.bf16.mxu0 0
          %1013 = vmatpush1.bf16.msra.mxu0 0
          %1014 = vmatprep.subr.bf16.mxu0 0
          %1015 = vmatpush1.bf16.msra.mxu0 0
          %1016 = vmatprep.subr.bf16.mxu0 0
          %1017 = vmatpush1.bf16.msra.mxu0 0
          %1018 = vmatprep.subr.bf16.mxu0 0
          %1019 = vmatpush1.bf16.msra.mxu0 0
          %1020 = vmatprep.subr.bf16.mxu0 0
          %1021 = vmatpush1.bf16.msra.mxu0 0
          %1022 = vmatprep.subr.bf16.mxu0 0
          %1023 = vmatpush1.bf16.msra.mxu0 0
          %1024 = vmatprep.subr.bf16.mxu0 0
          %1025 = vmatpush1.bf16.msra.mxu0 0
          %1026 = vmatprep.mubr.bf16.mxu0 0
          %1027 = vmatmul.mubr.bf16.gmra.mrb[0].mxu0 %v992
          %v1028 = vpop.f32.mrb[0].mxu0
          %v1029 = vadd.f32 %v977, %v1028
          %v1030 = vpop.f32.mrb[0].mxu0
          %v1031 = vpop.f32.mrb[0].mxu0
          %v1032 = vpop.f32.mrb[0].mxu0
          %1033 = vdwg.mxu0
          %v1034 = vmul.f32 %v1029, 1.702
          %v1035 = vxor.u32 %v1034, 2147483648
          %v1036 = vmul.f32 %v1035, 1.442695
          %v1037 = vpow.pop %v1036
          %v1038 = vadd.f32 %v1037, 1.0
          %v1039 = vrcp.pop %v1038
          %v1040 = vmul.f32 1.0, %v1039
          %v1041 = vmul.f32 %v1029, %v1040
          %v1042 = vpack.c.bf16 %v1041, %v1041
          %v1043 = vld [vmem:[#allocation22] sm:$0xf]
          %v1044 = vld [vmem:[#allocation22 + $0x4] sm:$0xf]
          %v1045 = vld [vmem:[#allocation22 + $0x8] sm:$0xf]
          %v1046 = vld [vmem:[#allocation22 + $0xc] sm:$0xf]
          %v1047 = vld [vmem:[#allocation22 + $0x10] sm:$0xf]
          %v1048 = vld [vmem:[#allocation22 + $0x14] sm:$0xf]
          %v1049 = vld [vmem:[#allocation22 + $0x18] sm:$0xf]
          %v1050 = vld [vmem:[#allocation22 + $0x1c] sm:$0xf]
          %v1051 = vld [vmem:[#allocation22 + $0x20] sm:$0xf]
          %v1052 = vld [vmem:[#allocation22 + $0x24] sm:$0xf]
          %v1053 = vld [vmem:[#allocation22 + $0x28] sm:$0xf]
          %v1054 = vld [vmem:[#allocation22 + $0x2c] sm:$0xf]
          %v1055 = vld [vmem:[#allocation22 + $0x30] sm:$0xf]
          %v1056 = vld [vmem:[#allocation22 + $0x34] sm:$0xf]
          %v1057 = vld [vmem:[#allocation22 + $0x38] sm:$0xf]
          %v1058 = vld [vmem:[#allocation22 + $0x3c] sm:$0xf]
          %v1059 = vld [vmem:[#allocation24] sm:$0x1]
          %v1061 = vlaneseq
          %v1062 = vshrl.u32 %v1061, 7
          %v1063 = vsub.s32 0, %v1062
          %v1064 = vrot.slane %v1059, %v1063
          %v1082 = vunpack.c.l.b16 %v1043
          %v1083 = vunpack.c.l.b16 %v1044
          %v1084 = vunpack.c.l.b16 %v1045
          %v1085 = vunpack.c.l.b16 %v1046
          %v1086 = vunpack.c.l.b16 %v1047
          %v1087 = vunpack.c.l.b16 %v1048
          %v1088 = vunpack.c.l.b16 %v1049
          %v1089 = vunpack.c.l.b16 %v1050
          %v1090 = vunpack.c.l.b16 %v1051
          %v1091 = vunpack.c.l.b16 %v1052
          %v1092 = vunpack.c.l.b16 %v1053
          %v1093 = vunpack.c.l.b16 %v1054
          %v1094 = vunpack.c.l.b16 %v1055
          %v1095 = vunpack.c.l.b16 %v1056
          %v1096 = vunpack.c.l.b16 %v1057
          %v1097 = vunpack.c.l.b16 %v1058
          %v1098 = vpack.c.b16 %v1083, %v1082
          %v1099 = vpack.c.b16 %v1085, %v1084
          %v1100 = vpack.c.b16 %v1087, %v1086
          %v1101 = vpack.c.b16 %v1089, %v1088
          %v1102 = vpack.c.b16 %v1091, %v1090
          %v1103 = vpack.c.b16 %v1093, %v1092
          %v1104 = vpack.c.b16 %v1095, %v1094
          %v1105 = vpack.c.b16 %v1097, %v1096
          %1114 = vmatprep.subr.bf16.mxu0 0
          %1115 = vmatpush1.bf16.msra.mxu0 %v1098
          %1116 = vmatprep.subr.bf16.mxu0 0
          %1117 = vmatpush1.bf16.msra.mxu0 %v1099
          %1118 = vmatprep.subr.bf16.mxu0 0
          %1119 = vmatpush1.bf16.msra.mxu0 %v1100
          %1120 = vmatprep.subr.bf16.mxu0 0
          %1121 = vmatpush1.bf16.msra.mxu0 %v1101
          %1122 = vmatprep.subr.bf16.mxu0 0
          %1123 = vmatpush1.bf16.msra.mxu0 %v1102
          %1124 = vmatprep.subr.bf16.mxu0 0
          %1125 = vmatpush1.bf16.msra.mxu0 %v1103
          %1126 = vmatprep.subr.bf16.mxu0 0
          %1127 = vmatpush1.bf16.msra.mxu0 %v1104
          %1128 = vmatprep.subr.bf16.mxu0 0
          %1129 = vmatpush1.bf16.msra.mxu0 %v1105
          %1130 = vmatprep.subr.bf16.mxu0 0
          %1131 = vmatpush1.bf16.msra.mxu0 0
          %1132 = vmatprep.subr.bf16.mxu0 0
          %1133 = vmatpush1.bf16.msra.mxu0 0
          %1134 = vmatprep.subr.bf16.mxu0 0
          %1135 = vmatpush1.bf16.msra.mxu0 0
          %1136 = vmatprep.subr.bf16.mxu0 0
          %1137 = vmatpush1.bf16.msra.mxu0 0
          %1138 = vmatprep.subr.bf16.mxu0 0
          %1139 = vmatpush1.bf16.msra.mxu0 0
          %1140 = vmatprep.subr.bf16.mxu0 0
          %1141 = vmatpush1.bf16.msra.mxu0 0
          %1142 = vmatprep.subr.bf16.mxu0 0
          %1143 = vmatpush1.bf16.msra.mxu0 0
          %1144 = vmatprep.subr.bf16.mxu0 0
          %1145 = vmatpush1.bf16.msra.mxu0 0
          %1146 = vmatprep.mubr.bf16.mxu0 0
          %1147 = vmatmul.mubr.bf16.gmra.mrb[0].mxu0 %v1042
          %v1148 = vpop.f32.mrb[0].mxu0
          %v1149 = vadd.f32 %v1064, %v1148
          %v1150 = vpop.f32.mrb[0].mxu0
          %v1151 = vpop.f32.mrb[0].mxu0
          %v1152 = vpop.f32.mrb[0].mxu0
          %1153 = vdwg.mxu0
          %v1154 = vadd.f32 %v936, %v1149
          %1155 = vst.msk [vmem:[%s625] sm:$0xff] %vm920, %v1154
        $region132: #{tpu_custom_call.1} parent=71 // pred_fallthru
          _
        %s1156 = sand.u32 %s334, 1
        %s1157 = scalar_lea.sflag [#allocation6], %s1156
        %s1158 = sand.u32 %s334, 1
        %s1159 = smul.addr %s1158, 8
        %s1160 = scalar_lea.vmem [#allocation25], %s1159
        // Predicated region
        $region133: #{tpu_custom_call.1} parent=71 // pred_check
          %p1161 = pneg %p344
        $region134: #{tpu_custom_call.1} parent=71 // pred_check_branch
          %1163 = sbr.rel (%p1161) target = $region136
        $region135: #{tpu_custom_call.1} parent=71 // pred_region
          %s1165 = ssub.s32 128, 128
          %1166 = vsyncadd %s1157, %s1165
          %s1167 = smul.addr %s40, 128
          %s1168 = scalar_lea.hbm %s13, %s1167
          %s1170 = sshll.u32 %s1160, 4
          %s1171 = int_to_ptr.vmem [resolvable:$true] %s1170
          %1173 = dma.vmem_to_hbm [thread:$0]  %s1171, 128, %s1168, %s1157
        $region136: #{tpu_custom_call.1} parent=71 // pred_fallthru
          _
      $region72: #{tpu_custom_call.1} parent=5 // pred_fallthru
        _
      %p1174 = scmp.le.s32.totalorder 2, %s31
      // Predicated region
      $region137: #{tpu_custom_call.1} parent=5 // pred_check
        %p1175 = pneg %p1174
      $region138: #{tpu_custom_call.1} parent=5 // pred_check_branch
        %1177 = sbr.rel (%p1175) target = $region140
      $region139: #{tpu_custom_call.1} parent=5 // pred_region
        %s1178 = ssub.s32 %s31, 2
        // Predicated region
        $region141: #{tpu_custom_call.1} parent=139 // pred_check
          %p1179 = pneg %p350
        $region142: #{tpu_custom_call.1} parent=139 // pred_check_branch
          %1181 = sbr.rel (%p1179) target = $region144
        $region143: #{tpu_custom_call.1} parent=139 // pred_region
          %s1182 = sand.u32 %s335, 1
          %s1183 = scalar_lea.sflag [#allocation6], %s1182
          %s1184 = sand.u32 %s335, 1
          %s1185 = smul.addr %s1184, 8
          %s1186 = scalar_lea.vmem [#allocation25], %s1185
          %1187 = dma.done %s1183, 128
        $region144: #{tpu_custom_call.1} parent=139 // pred_fallthru
          _
      $region140: #{tpu_custom_call.1} parent=5 // pred_fallthru
        _
    $region6: #{tpu_custom_call.1} parent=1 // loop_footer
      %s35 = sadd.s32 1, %s31
    $region7: #{tpu_custom_call.1} parent=1 // loop_footer_branch
      %30 = sbr.rel target = $region3
    $region8: #{tpu_custom_call.1} parent=1 // loop_exit
      _
    %1188 = vsyncpa [#allocation5], 1
    %s1189 = scalar_lea.sflag [#allocation5], 1
    %1190 = vsyncpa %s1189, 1
    %1191 = vsyncpa [#allocation8], 1
    %1192 = vsyncpa [#allocation11], 1
    %1193 = vsyncpa [#allocation14], 1
    %1194 = vsyncpa [#allocation17], 1
    %1195 = vsyncpa [#allocation20], 1
    %1196 = vsyncpa [#allocation23], 1
    %1197 = vsyncpa [#allocation6], 1
    %s1198 = scalar_lea.sflag [#allocation6], 1
    %1199 = vsyncpa %s1198, 1

</llo_original>
